<compile_context>
chip_gen: v5e
topology: v5e:2x2
jax: 0.10.0
libtpu: 0.0.40
codegen_flags: <defaults>
</compile_context>

<pallas_src>
import functools

import numpy as np
import jax
import jax.numpy as jnp
from jax.experimental import pallas as pl
from jax.experimental.pallas import tpu as pltpu


def _round_up(x, m):
    return ((x + m - 1) // m) * m


# ----------------------------------------------------------------------------
# Shared upsample math: PyTorch bilinear x2 (align_corners=False) as edge-clamped
# shift-and-FMA.  y: (H, W, C) -> list of 4 phases, phase f = 2*p + q with
#   phase[f][j, k, :] == upsampled[2j + p, 2k + q, :]
# ----------------------------------------------------------------------------
def _upsample_phases(y):
    # H direction: even rows = 0.25*y[j-1] + 0.75*y[j]; odd rows = 0.75*y[j] + 0.25*y[j+1]
    # (edge-clamped; matches src = (i+0.5)/2 - 0.5 with the negative-source clamp).
    y_hm = jnp.concatenate([y[:1], y[:-1]], axis=0)            # y[max(j-1, 0)]
    y_hp = jnp.concatenate([y[1:], y[-1:]], axis=0)            # y[min(j+1, H-1)]
    rows = (0.25 * y_hm + 0.75 * y, 0.75 * y + 0.25 * y_hp)    # p = 0, 1
    phases = []
    for r in rows:
        r_wm = jnp.concatenate([r[:, :1], r[:, :-1]], axis=1)  # r[:, max(k-1, 0)]
        r_wp = jnp.concatenate([r[:, 1:], r[:, -1:]], axis=1)  # r[:, min(k+1, W-1)]
        phases.append(0.25 * r_wm + 0.75 * r)                  # q = 0
        phases.append(0.75 * r + 0.25 * r_wp)                  # q = 1
    return phases


# ----------------------------------------------------------------------------
# Primary kernel: GEMM(+bias) and bilinear x2 upsample fused, one grid step per image.
# ----------------------------------------------------------------------------
def _decoder_fused_kernel(x_ref, w_ref, b_ref, y_ref, up_ref):
    # x_ref: (1, H, W, Cin_p) f32   w_ref: (Cin_p, Cout_p) bf16   b_ref: (1, Cout_p) f32
    # y_ref: (1, H, W, Cout_p) f32  up_ref: (4, H, W, Cout_p) f32 (phase f = 2p + q)
    _, H, W, cin_p = x_ref.shape
    cout_p = w_ref.shape[1]
    # (H, W, C) -> (H*W, C) is a pure layout no-op when W % 8 == 0 and C % 128 == 0
    # (wrapper guarantees both before selecting this kernel).
    x2d = x_ref[0].reshape(H * W, cin_p).astype(jnp.bfloat16)
    acc = jnp.dot(x2d, w_ref[...], preferred_element_type=jnp.float32)   # MXU, f32 acc
    y = (acc + b_ref[...]).reshape(H, W, cout_p)                         # fused bias epilogue
    y_ref[0] = y.astype(y_ref.dtype)
    ph = _upsample_phases(y)                                             # VPU shift-and-FMA
    for f in range(4):
        up_ref[f] = ph[f].astype(up_ref.dtype)


def fused_decoder_block(x_nhwc_p, w_bf16, b):
    """x_nhwc_p: (N, H, W, Cin_p) f32, w_bf16: (Cin_p, Cout_p) bf16, b: (1, Cout_p) f32.
    Returns y (N, H, W, Cout_p) f32 and phases (N*4, H, W, Cout_p) f32 where
    phases[n*4 + 2p + q, j, k, c] == upsampled[n, 2j+p, 2k+q, c]."""
    N, H, W, cin_p = x_nhwc_p.shape
    cout_p = w_bf16.shape[1]
    return pl.pallas_call(
        _decoder_fused_kernel,
        out_shape=(jax.ShapeDtypeStruct((N, H, W, cout_p), jnp.float32),
                   jax.ShapeDtypeStruct((N * 4, H, W, cout_p), jnp.float32)),
        grid_spec=pltpu.PrefetchScalarGridSpec(
            num_scalar_prefetch=0,
            grid=(N,),
            in_specs=[
                pl.BlockSpec((1, H, W, cin_p), lambda n: (n, 0, 0, 0)),
                pl.BlockSpec((cin_p, cout_p), lambda n: (0, 0)),
                pl.BlockSpec((1, cout_p), lambda n: (0, 0)),
            ],
            out_specs=[
                pl.BlockSpec((1, H, W, cout_p), lambda n: (n, 0, 0, 0)),
                pl.BlockSpec((4, H, W, cout_p), lambda n: (n, 0, 0, 0)),
            ],
        ),
        compiler_params=pltpu.CompilerParams(dimension_semantics=("parallel",)),
    )(x_nhwc_p, w_bf16, b)


def _fused_fits_vmem(H, W, cin_p, cout_p, budget_bytes=12 * 1024 * 1024):
    # Conservative double-buffered estimate (stays under every generation's default scoped
    # VMEM, including v7x's smaller physical VMEM) plus slack for in-body intermediates.
    hw = H * W
    io = 2 * hw * cin_p * 4 + 2 * cin_p * cout_p * 2 + 2 * hw * cout_p * 4 + 2 * 4 * hw * cout_p * 4
    interm = hw * cin_p * 2 + 8 * hw * cout_p * 4
    return (io + interm) <= budget_bytes


# ----------------------------------------------------------------------------
# Fallback kernel 1: row-tiled GEMM + bias (used when the per-image fused tile won't fit)
# ----------------------------------------------------------------------------
def _pointwise_gemm_kernel(x_ref, w_ref, b_ref, o_ref):
    x = x_ref[...].astype(jnp.bfloat16)
    acc = jnp.dot(x, w_ref[...], preferred_element_type=jnp.float32)
    o_ref[...] = (acc + b_ref[...]).astype(o_ref.dtype)


def pointwise_gemm(x_rows, w_bf16, b, *, tm=512):
    """x_rows: (M, Cin_p) f32, w_bf16: (Cin_p, Cout_p) bf16, b: (1, Cout_p) -> (M, Cout_p) f32."""
    M, cin_p = x_rows.shape
    cout_p = w_bf16.shape[1]
    # Keep >= 2 grid steps (v7x has 2 TensorCores) while amortizing ~0.35us/step overhead.
    while tm > 8 and M <= tm:
        tm //= 2
    m_pad = _round_up(max(M, tm), tm)
    if m_pad != M:
        x_rows = jnp.pad(x_rows, ((0, m_pad - M), (0, 0)))
    out = pl.pallas_call(
        _pointwise_gemm_kernel,
        out_shape=jax.ShapeDtypeStruct((m_pad, cout_p), jnp.float32),
        grid_spec=pltpu.PrefetchScalarGridSpec(
            num_scalar_prefetch=0,
            grid=(m_pad // tm,),
            in_specs=[
                pl.BlockSpec((tm, cin_p), lambda i: (i, 0)),
                pl.BlockSpec((cin_p, cout_p), lambda i: (0, 0)),
                pl.BlockSpec((1, cout_p), lambda i: (0, 0)),
            ],
            out_specs=pl.BlockSpec((tm, cout_p), lambda i: (i, 0)),
        ),
        compiler_params=pltpu.CompilerParams(dimension_semantics=("parallel",)),
    )(x_rows, w_bf16, b)
    return out[:M] if m_pad != M else out


# ----------------------------------------------------------------------------
# Fallback kernel 2: standalone bilinear x2 upsample (NHWC, channels on lanes)
# ----------------------------------------------------------------------------
def _upsample_x2_kernel(x_ref, o_ref):
    ph = _upsample_phases(x_ref[0])
    for f in range(4):
        o_ref[f] = ph[f].astype(o_ref.dtype)


def bilinear_upsample_x2_nhwc(x_nhwc):
    N, H, W, C = x_nhwc.shape
    return pl.pallas_call(
        _upsample_x2_kernel,
        out_shape=jax.ShapeDtypeStruct((N * 4, H, W, C), jnp.float32),
        grid_spec=pltpu.PrefetchScalarGridSpec(
            num_scalar_prefetch=0,
            grid=(N,),
            in_specs=[pl.BlockSpec((1, H, W, C), lambda n: (n, 0, 0, 0))],
            out_specs=pl.BlockSpec((4, H, W, C), lambda n: (n, 0, 0, 0)),
        ),
        compiler_params=pltpu.CompilerParams(dimension_semantics=("parallel",)),
    )(x_nhwc)


# ----------------------------------------------------------------------------
# Parameter init (PyTorch-equivalent, BN in eval mode) and BN/conv fusion
# ----------------------------------------------------------------------------
def init_decoder_block_params(key, in_channels, out_channels):
    k1, k2, k3, k4, k5, k6, k7, k8 = jax.random.split(key, 8)
    eps = 1e-5
    # conv weights, PyTorch shape [out, in, 1, 1] -> stored as (in, out) for x @ W
    w1 = jax.random.normal(k1, (in_channels, in_channels), jnp.float32) * 0.2
    w2 = jax.random.normal(k2, (in_channels, out_channels), jnp.float32) * 0.2
    g1 = 1.0 + 0.1 * jax.random.normal(k3, (in_channels,), jnp.float32)
    be1 = 0.1 * jax.random.normal(k4, (in_channels,), jnp.float32)
    rm1 = 0.1 * jax.random.normal(k5, (in_channels,), jnp.float32)
    rv1 = jnp.abs(1.0 + 0.1 * jax.random.normal(k6, (in_channels,), jnp.float32))
    g2 = 1.0 + 0.1 * jax.random.normal(k7, (out_channels,), jnp.float32)
    be2 = 0.1 * jax.random.normal(k8, (out_channels,), jnp.float32)
    rm2 = jnp.zeros((out_channels,), jnp.float32)
    rv2 = jnp.ones((out_channels,), jnp.float32)
    s1 = g1 / jnp.sqrt(rv1 + eps)
    b1 = be1 - rm1 * s1
    s2 = g2 / jnp.sqrt(rv2 + eps)
    b2 = be2 - rm2 * s2
    return dict(
        w1=w1, s1=s1.reshape(1, -1), b1=b1.reshape(1, -1),
        w2=w2, s2=s2.reshape(1, -1), b2=b2.reshape(1, -1),
    )


def _fold_and_pad_params(params, cin, cout, cin_p, cout_p):
    # ((x @ w1) * s1 + b1) @ w2 * s2 + b2  ==  x @ W + b
    #   W = (w1 * s1) @ (w2 * s2),  b = b1 @ (w2 * s2) + b2
    w2s = params["w2"] * params["s2"]                         # (Cin, Cout)
    Wf = (params["w1"] * params["s1"]) @ w2s                  # (Cin, Cout)
    bf = params["b1"] @ w2s + params["b2"]                    # (1, Cout)
    W_p = jnp.zeros((cin_p, cout_p), jnp.float32).at[:cin, :cout].set(Wf)
    b_p = jnp.zeros((1, cout_p), jnp.float32).at[:, :cout].set(bf)
    return W_p, b_p


# ----------------------------------------------------------------------------
# DecoderBlock wrapper (NCHW in / NCHW out, NHWC internally)
# ----------------------------------------------------------------------------
@functools.partial(jax.jit, static_argnames=("down",))
def decoder_block_forward(x_nchw, params, down=True):
    """x_nchw: (N, Cin, H, W) f32.  Returns (xout, x) like the PyTorch module (NCHW)."""
    N, Cin, H, W = x_nchw.shape
    Cout = params["w2"].shape[1]
    cin_p = _round_up(Cin, 128)       # lane-dense GEMM operands
    cout_p = _round_up(Cout, 128)     # lane-dense stores
    W_fused, b_fused = _fold_and_pad_params(params, Cin, Cout, cin_p, cout_p)
    W_bf16 = W_fused.astype(jnp.bfloat16)   # cast once: halves weight DMA, removes per-step cast

    # Single boundary layout change: NCHW -> NHWC (channels on lanes), zero-pad channels.
    x_nhwc = jnp.transpose(x_nchw, (0, 2, 3, 1))
    x_nhwc_p = jnp.pad(x_nhwc, ((0, 0), (0, 0), (0, 0), (0, cin_p - Cin)))

    use_fused = down and (W % 8 == 0) and _fused_fits_vmem(H, W, cin_p, cout_p)

    if use_fused:
        # One kernel: GEMM + bias + upsample phases; y never round-trips HBM before upsampling.
        y_nhwc, ph = fused_decoder_block(x_nhwc_p, W_bf16, b_fused)
    else:
        x_rows = x_nhwc_p.reshape(N * H * W, cin_p)
        y_rows = pointwise_gemm(x_rows, W_bf16, b_fused)      # (N*H*W, cout_p)
        y_nhwc = y_rows.reshape(N, H, W, cout_p)
        ph = bilinear_upsample_x2_nhwc(y_nhwc) if down else None

    # y back to NCHW only at the module boundary.
    y_nchw = jnp.transpose(y_nhwc[..., :Cout], (0, 3, 1, 2))

    if down:
        ph = ph.reshape(N, 2, 2, H, W, cout_p)[..., :Cout]    # (n, p, q, j, k, c)
        # (n, p, q, j, k, c) -> (n, c, j, p, k, q); trailing reshape to (N, C, 2H, 2W) is a
        # free row-major reshape, so this single transpose is the only one xout needs.
        xout = jnp.transpose(ph, (0, 5, 3, 1, 4, 2)).reshape(N, Cout, 2 * H, 2 * W)
    else:
        # TODO(synk): PyTorch forward references `xout` unconditionally; with down=False it
        # raises UnboundLocalError, so only down=True is meaningful here.
        xout = None
    return xout, y_nchw


# ----------------------------------------------------------------------------
# Pure-JAX f32 reference (unfused path + interpolation matrices) for spot-checks
# ----------------------------------------------------------------------------
def _interp_matrix(n_in):
    """(2*n_in, n_in) matrix reproducing PyTorch bilinear x2 (align_corners=False) on one axis."""
    n_out = 2 * n_in
    A = np.zeros((n_out, n_in), dtype=np.float64)
    for i in range(n_out):
        src = (i + 0.5) * 0.5 - 0.5
        src = max(src, 0.0)
        i0 = int(np.floor(src))
        i1 = min(i0 + 1, n_in - 1)
        lam1 = src - i0
        A[i, i0] += 1.0 - lam1
        A[i, i1] += lam1
    return A


def _reference_forward(x_nchw, params):
    N, Cin, H, W = x_nchw.shape
    x_rows = jnp.transpose(x_nchw, (0, 2, 3, 1)).reshape(-1, Cin)
    h = x_rows @ params["w1"] * params["s1"] + params["b1"]
    y_rows = h @ params["w2"] * params["s2"] + params["b2"]
    Cout = params["w2"].shape[1]
    y = jnp.transpose(y_rows.reshape(N, H, W, Cout), (0, 3, 1, 2))
    A_h = jnp.asarray(_interp_matrix(H), jnp.float32)
    A_w = jnp.asarray(_interp_matrix(W), jnp.float32)
    xout = jnp.einsum("ph,nchw,qw->ncpq", A_h, y, A_w)
    return xout, y


if __name__ == "__main__":
    key = jax.random.PRNGKey(0)
    params = init_decoder_block_params(jax.random.PRNGKey(1), 4, 8)

    # --- primary fused single-kernel path (W % 8 == 0) ---
    N, Cin, Cout, H, W = 2, 4, 8, 16, 16
    x = jax.random.normal(key, (N, Cin, H, W), jnp.float32)
    xout, y = decoder_block_forward(x, params, down=True)
    xout, y = jax.block_until_ready(xout), jax.block_until_ready(y)
    assert y.shape == (N, Cout, H, W)
    assert xout.shape == (N, Cout, 2 * H, 2 * W)
    xout_ref, y_ref = _reference_forward(x, params)
    # The GEMM intentionally feeds the MXU bf16 operands (f32 accumulate), so compare against
    # the full-f32 reference with a bf16-appropriate tolerance; the upsample is exact f32 FMA.
    np.testing.assert_allclose(np.asarray(y), np.asarray(y_ref), rtol=2e-2, atol=2e-2)
    np.testing.assert_allclose(np.asarray(xout), np.asarray(xout_ref), rtol=2e-2, atol=2e-2)

    # --- fallback two-kernel path (W % 8 != 0 exercises row-tiled GEMM + separate upsample) ---
    H2, W2 = 12, 12
    x2 = jax.random.normal(jax.random.PRNGKey(2), (N, Cin, H2, W2), jnp.float32)
    xout2, y2 = decoder_block_forward(x2, params, down=True)
    xout2, y2 = jax.block_until_ready(xout2), jax.block_until_ready(y2)
    xout2_ref, y2_ref = _reference_forward(x2, params)
    np.testing.assert_allclose(np.asarray(y2), np.asarray(y2_ref), rtol=2e-2, atol=2e-2)
    np.testing.assert_allclose(np.asarray(xout2), np.asarray(xout2_ref), rtol=2e-2, atol=2e-2)

    print("KERNEL_OK")
</pallas_src>

<mosaic_0001>
module attributes {stable_mosaic.version = 11 : i64} {
  func.func @_decoder_fused_kernel(%arg0: i32, %arg1: memref<1x16x16x128xf32, #tpu.memory_space<vmem>>, %arg2: memref<128x128xbf16, #tpu.memory_space<vmem>>, %arg3: memref<1x128xf32, #tpu.memory_space<vmem>>, %arg4: memref<1x16x16x128xf32, #tpu.memory_space<vmem>>, %arg5: memref<4x16x16x128xf32, #tpu.memory_space<vmem>>) attributes {dimension_semantics = [#tpu.dimension_semantics<parallel>], iteration_bounds = array<i64: 2>, scalar_prefetch = 0 : i64, scratch_operands = 0 : i64, tpu.core_type = #tpu.core_type<tc>, window_params = [{transform_indices = @transform_0, window_bounds = array<i64: 1, 16, 16, 128>}, {pipeline_mode = #tpu.pipeline_mode<synchronous>, transform_indices = @transform_1, window_bounds = array<i64: 128, 128>}, {pipeline_mode = #tpu.pipeline_mode<synchronous>, transform_indices = @transform_2, window_bounds = array<i64: 1, 128>}, {transform_indices = @transform_3, window_bounds = array<i64: 1, 16, 16, 128>}, {transform_indices = @transform_4, window_bounds = array<i64: 4, 16, 16, 128>}]} {
    %c0 = arith.constant 0 : index
    %c0_0 = arith.constant 0 : index
    %c0_1 = arith.constant 0 : index
    %c0_2 = arith.constant 0 : index
    %0 = vector.load %arg1[%c0, %c0_0, %c0_1, %c0_2] : memref<1x16x16x128xf32, #tpu.memory_space<vmem>>, vector<1x16x16x128xf32>
    %1 = vector.shape_cast %0 : vector<1x16x16x128xf32> to vector<16x16x128xf32>
    %2 = vector.shape_cast %1 : vector<16x16x128xf32> to vector<256x128xf32>
    %3 = arith.truncf %2 : vector<256x128xf32> to vector<256x128xbf16>
    %c0_3 = arith.constant 0 : index
    %c0_4 = arith.constant 0 : index
    %4 = vector.load %arg2[%c0_3, %c0_4] : memref<128x128xbf16, #tpu.memory_space<vmem>>, vector<128x128xbf16>
    %cst = arith.constant dense<0.000000e+00> : vector<256x128xf32>
    %5 = tpu.matmul %3, %4, %cst {dimension_numbers = #tpu.dot_dimension_numbers<[1], [0], [0], [1], [0, 0, 1, 1], [], []>} : vector<256x128xbf16>, vector<128x128xbf16>, vector<256x128xf32> -> vector<256x128xf32>
    %c0_5 = arith.constant 0 : index
    %c0_6 = arith.constant 0 : index
    %6 = vector.load %arg3[%c0_5, %c0_6] : memref<1x128xf32, #tpu.memory_space<vmem>>, vector<1x128xf32>
    %7 = vector.broadcast %6 : vector<1x128xf32> to vector<256x128xf32>
    %8 = arith.addf %5, %7 : vector<256x128xf32>
    %9 = vector.shape_cast %8 : vector<256x128xf32> to vector<16x16x128xf32>
    %c0_7 = arith.constant 0 : index
    %c0_8 = arith.constant 0 : index
    %c0_9 = arith.constant 0 : index
    %c0_10 = arith.constant 0 : index
    %10 = vector.load %arg4[%c0_7, %c0_8, %c0_9, %c0_10] : memref<1x16x16x128xf32, #tpu.memory_space<vmem>>, vector<1x16x16x128xf32>
    %11 = vector.shape_cast %10 : vector<1x16x16x128xf32> to vector<16x16x128xf32>
    %12 = vector.shape_cast %9 : vector<16x16x128xf32> to vector<1x16x16x128xf32>
    tpu.vector_store %arg4[%c0_7, %c0_8, %c0_9, %c0_10], %12 {strides = array<i32>} : memref<1x16x16x128xf32, #tpu.memory_space<vmem>>, vector<1x16x16x128xf32>,
    %13 = vector.extract_strided_slice %9 {offsets = [0, 0, 0], sizes = [1, 16, 128], strides = [1, 1, 1]} : vector<16x16x128xf32> to vector<1x16x128xf32>
    %14 = vector.extract_strided_slice %9 {offsets = [0, 0, 0], sizes = [15, 16, 128], strides = [1, 1, 1]} : vector<16x16x128xf32> to vector<15x16x128xf32>
    %15 = tpu.concatenate %13, %14 in 0 : vector<1x16x128xf32>, vector<15x16x128xf32> -> vector<16x16x128xf32>
    %16 = vector.extract_strided_slice %9 {offsets = [1, 0, 0], sizes = [15, 16, 128], strides = [1, 1, 1]} : vector<16x16x128xf32> to vector<15x16x128xf32>
    %17 = vector.extract_strided_slice %9 {offsets = [15, 0, 0], sizes = [1, 16, 128], strides = [1, 1, 1]} : vector<16x16x128xf32> to vector<1x16x128xf32>
    %18 = tpu.concatenate %16, %17 in 0 : vector<15x16x128xf32>, vector<1x16x128xf32> -> vector<16x16x128xf32>
    %cst_11 = arith.constant 2.500000e-01 : f32
    %19 = vector.broadcast %cst_11 : f32 to vector<16x16x128xf32>
    %20 = arith.mulf %19, %15 : vector<16x16x128xf32>
    %cst_12 = arith.constant 7.500000e-01 : f32
    %21 = vector.broadcast %cst_12 : f32 to vector<16x16x128xf32>
    %22 = arith.mulf %21, %9 : vector<16x16x128xf32>
    %23 = arith.addf %20, %22 : vector<16x16x128xf32>
    %cst_13 = arith.constant 7.500000e-01 : f32
    %24 = vector.broadcast %cst_13 : f32 to vector<16x16x128xf32>
    %25 = arith.mulf %24, %9 : vector<16x16x128xf32>
    %cst_14 = arith.constant 2.500000e-01 : f32
    %26 = vector.broadcast %cst_14 : f32 to vector<16x16x128xf32>
    %27 = arith.mulf %26, %18 : vector<16x16x128xf32>
    %28 = arith.addf %25, %27 : vector<16x16x128xf32>
    %29 = vector.extract_strided_slice %23 {offsets = [0, 0, 0], sizes = [16, 1, 128], strides = [1, 1, 1]} : vector<16x16x128xf32> to vector<16x1x128xf32>
    %30 = vector.extract_strided_slice %23 {offsets = [0, 0, 0], sizes = [16, 15, 128], strides = [1, 1, 1]} : vector<16x16x128xf32> to vector<16x15x128xf32>
    %31 = tpu.concatenate %29, %30 in 1 : vector<16x1x128xf32>, vector<16x15x128xf32> -> vector<16x16x128xf32>
    %32 = vector.extract_strided_slice %23 {offsets = [0, 1, 0], sizes = [16, 15, 128], strides = [1, 1, 1]} : vector<16x16x128xf32> to vector<16x15x128xf32>
    %33 = vector.extract_strided_slice %23 {offsets = [0, 15, 0], sizes = [16, 1, 128], strides = [1, 1, 1]} : vector<16x16x128xf32> to vector<16x1x128xf32>
    %34 = tpu.concatenate %32, %33 in 1 : vector<16x15x128xf32>, vector<16x1x128xf32> -> vector<16x16x128xf32>
    %cst_15 = arith.constant 2.500000e-01 : f32
    %35 = vector.broadcast %cst_15 : f32 to vector<16x16x128xf32>
    %36 = arith.mulf %35, %31 : vector<16x16x128xf32>
    %cst_16 = arith.constant 7.500000e-01 : f32
    %37 = vector.broadcast %cst_16 : f32 to vector<16x16x128xf32>
    %38 = arith.mulf %37, %23 : vector<16x16x128xf32>
    %39 = arith.addf %36, %38 : vector<16x16x128xf32>
    %cst_17 = arith.constant 7.500000e-01 : f32
    %40 = vector.broadcast %cst_17 : f32 to vector<16x16x128xf32>
    %41 = arith.mulf %40, %23 : vector<16x16x128xf32>
    %cst_18 = arith.constant 2.500000e-01 : f32
    %42 = vector.broadcast %cst_18 : f32 to vector<16x16x128xf32>
    %43 = arith.mulf %42, %34 : vector<16x16x128xf32>
    %44 = arith.addf %41, %43 : vector<16x16x128xf32>
    %45 = vector.extract_strided_slice %28 {offsets = [0, 0, 0], sizes = [16, 1, 128], strides = [1, 1, 1]} : vector<16x16x128xf32> to vector<16x1x128xf32>
    %46 = vector.extract_strided_slice %28 {offsets = [0, 0, 0], sizes = [16, 15, 128], strides = [1, 1, 1]} : vector<16x16x128xf32> to vector<16x15x128xf32>
    %47 = tpu.concatenate %45, %46 in 1 : vector<16x1x128xf32>, vector<16x15x128xf32> -> vector<16x16x128xf32>
    %48 = vector.extract_strided_slice %28 {offsets = [0, 1, 0], sizes = [16, 15, 128], strides = [1, 1, 1]} : vector<16x16x128xf32> to vector<16x15x128xf32>
    %49 = vector.extract_strided_slice %28 {offsets = [0, 15, 0], sizes = [16, 1, 128], strides = [1, 1, 1]} : vector<16x16x128xf32> to vector<16x1x128xf32>
    %50 = tpu.concatenate %48, %49 in 1 : vector<16x15x128xf32>, vector<16x1x128xf32> -> vector<16x16x128xf32>
    %cst_19 = arith.constant 2.500000e-01 : f32
    %51 = vector.broadcast %cst_19 : f32 to vector<16x16x128xf32>
    %52 = arith.mulf %51, %47 : vector<16x16x128xf32>
    %cst_20 = arith.constant 7.500000e-01 : f32
    %53 = vector.broadcast %cst_20 : f32 to vector<16x16x128xf32>
    %54 = arith.mulf %53, %28 : vector<16x16x128xf32>
    %55 = arith.addf %52, %54 : vector<16x16x128xf32>
    %cst_21 = arith.constant 7.500000e-01 : f32
    %56 = vector.broadcast %cst_21 : f32 to vector<16x16x128xf32>
    %57 = arith.mulf %56, %28 : vector<16x16x128xf32>
    %cst_22 = arith.constant 2.500000e-01 : f32
    %58 = vector.broadcast %cst_22 : f32 to vector<16x16x128xf32>
    %59 = arith.mulf %58, %50 : vector<16x16x128xf32>
    %60 = arith.addf %57, %59 : vector<16x16x128xf32>
    %c0_23 = arith.constant 0 : index
    %c0_24 = arith.constant 0 : index
    %c0_25 = arith.constant 0 : index
    %c0_26 = arith.constant 0 : index
    %61 = vector.load %arg5[%c0_23, %c0_24, %c0_25, %c0_26] : memref<4x16x16x128xf32, #tpu.memory_space<vmem>>, vector<1x16x16x128xf32>
    %62 = vector.shape_cast %61 : vector<1x16x16x128xf32> to vector<16x16x128xf32>
    %63 = vector.shape_cast %39 : vector<16x16x128xf32> to vector<1x16x16x128xf32>
    tpu.vector_store %arg5[%c0_23, %c0_24, %c0_25, %c0_26], %63 {strides = array<i32>} : memref<4x16x16x128xf32, #tpu.memory_space<vmem>>, vector<1x16x16x128xf32>,
    %c1 = arith.constant 1 : index
    %c0_27 = arith.constant 0 : index
    %c0_28 = arith.constant 0 : index
    %c0_29 = arith.constant 0 : index
    %64 = vector.load %arg5[%c1, %c0_27, %c0_28, %c0_29] : memref<4x16x16x128xf32, #tpu.memory_space<vmem>>, vector<1x16x16x128xf32>
    %65 = vector.shape_cast %64 : vector<1x16x16x128xf32> to vector<16x16x128xf32>
    %66 = vector.shape_cast %44 : vector<16x16x128xf32> to vector<1x16x16x128xf32>
    tpu.vector_store %arg5[%c1, %c0_27, %c0_28, %c0_29], %66 {strides = array<i32>} : memref<4x16x16x128xf32, #tpu.memory_space<vmem>>, vector<1x16x16x128xf32>,
    %c2 = arith.constant 2 : index
    %c0_30 = arith.constant 0 : index
    %c0_31 = arith.constant 0 : index
    %c0_32 = arith.constant 0 : index
    %67 = vector.load %arg5[%c2, %c0_30, %c0_31, %c0_32] : memref<4x16x16x128xf32, #tpu.memory_space<vmem>>, vector<1x16x16x128xf32>
    %68 = vector.shape_cast %67 : vector<1x16x16x128xf32> to vector<16x16x128xf32>
    %69 = vector.shape_cast %55 : vector<16x16x128xf32> to vector<1x16x16x128xf32>
    tpu.vector_store %arg5[%c2, %c0_30, %c0_31, %c0_32], %69 {strides = array<i32>} : memref<4x16x16x128xf32, #tpu.memory_space<vmem>>, vector<1x16x16x128xf32>,
    %c3 = arith.constant 3 : index
    %c0_33 = arith.constant 0 : index
    %c0_34 = arith.constant 0 : index
    %c0_35 = arith.constant 0 : index
    %70 = vector.load %arg5[%c3, %c0_33, %c0_34, %c0_35] : memref<4x16x16x128xf32, #tpu.memory_space<vmem>>, vector<1x16x16x128xf32>
    %71 = vector.shape_cast %70 : vector<1x16x16x128xf32> to vector<16x16x128xf32>
    %72 = vector.shape_cast %60 : vector<16x16x128xf32> to vector<1x16x16x128xf32>
    tpu.vector_store %arg5[%c3, %c0_33, %c0_34, %c0_35], %72 {strides = array<i32>} : memref<4x16x16x128xf32, #tpu.memory_space<vmem>>, vector<1x16x16x128xf32>,
    return
  }
  func.func @transform_0(%arg0: i32) -> (i32, i32, i32, i32) {
    %c0_i32 = arith.constant 0 : i32
    %c0_i32_0 = arith.constant 0 : i32
    %c0_i32_1 = arith.constant 0 : i32
    %c0_i32_2 = arith.constant 0 : i32
    return %arg0, %c0_i32, %c0_i32_0, %c0_i32_1 : i32, i32, i32, i32
  }
  func.func @transform_1(%arg0: i32) -> (i32, i32) {
    %c0_i32 = arith.constant 0 : i32
    %c0_i32_0 = arith.constant 0 : i32
    %c0_i32_1 = arith.constant 0 : i32
    return %c0_i32, %c0_i32_0 : i32, i32
  }
  func.func @transform_2(%arg0: i32) -> (i32, i32) {
    %c0_i32 = arith.constant 0 : i32
    %c0_i32_0 = arith.constant 0 : i32
    %c0_i32_1 = arith.constant 0 : i32
    return %c0_i32, %c0_i32_0 : i32, i32
  }
  func.func @transform_3(%arg0: i32) -> (i32, i32, i32, i32) {
    %c0_i32 = arith.constant 0 : i32
    %c0_i32_0 = arith.constant 0 : i32
    %c0_i32_1 = arith.constant 0 : i32
    %c0_i32_2 = arith.constant 0 : i32
    return %arg0, %c0_i32, %c0_i32_0, %c0_i32_1 : i32, i32, i32, i32
  }
  func.func @transform_4(%arg0: i32) -> (i32, i32, i32, i32) {
    %c0_i32 = arith.constant 0 : i32
    %c0_i32_0 = arith.constant 0 : i32
    %c0_i32_1 = arith.constant 0 : i32
    %c0_i32_2 = arith.constant 0 : i32
    return %arg0, %c0_i32, %c0_i32_0, %c0_i32_1 : i32, i32, i32, i32
  }
}

</mosaic_0001>

<llo_original>
// kernel: decoder_block_forward.1
$region0: #{decoder_block_forward.1}
  #allocation0 [shape = 'u32[]', space=smem, size = 0x4, offset = 0x4, fixed_abs, tag = 'smem constant byte address 0x4 - core index']
  #allocation1 [shape = 'u32[72,128]{1,0:T(1,128)}', space=vmem, size = 0x9000, scoped, tag = 'internal scratch']
  %s0 = inlined_call_operand.vmem [shape: f32[2,16,16,128], index: 0, kind: input, shape index: {}]
  %s1 = inlined_call_operand.vmem [shape: bf16[128,128], index: 1, kind: input, shape index: {}]
  %s2 = inlined_call_operand.vmem [shape: f32[1,128], index: 2, kind: input, shape index: {}]
  %s3 = inlined_call_operand.vmem [shape: f32[2,16,16,128], index: 3, kind: output, shape index: {0}]
  %s4 = inlined_call_operand.vmem [shape: f32[8,16,16,128], index: 4, kind: output, shape index: {1}]
  %5 = xla_tuple %s3, %s4
  %s6 = sld [smem:[#allocation0]]
  $region53: #{decoder_block_forward.1} parent=0
    _
  %s8 = ssub.s32 1, %s6
  %s9 = scalar_select 0, %s8, %s6
  loop: start=0, step=1, limit=4
  $region2: #{decoder_block_forward.1} parent=0 // loop_pre_header
    _
  $region3: #{decoder_block_forward.1} parent=0 // loop_header
    %s11 = sphi 0, %s15
    %p12 = scmp.ge.s32.totalorder %s11, 4
    %s21 = sphi 0, %s23
    %s24 = sphi 0, %s21
    %s25 = sphi 0, %s24
    %s41 = sphi 0, %s25
    %s45 = sphi 0, %s45
    %s47 = sphi 0, %s45
    %s48 = sphi 0, %s47
    %s62 = sphi 0, %s48
    %s66 = sphi 0, %s66
    %s68 = sphi 0, %s66
    %s69 = sphi 0, %s68
    %s83 = sphi 0, %s69
    %s89 = sphi 0, %s91
    %s92 = sphi 0, %s89
    %s93 = sphi 0, %s92
    %s109 = sphi 0, %s93
    %s115 = sphi 0, %s117
    %s118 = sphi 0, %s115
    %s119 = sphi 0, %s118
    %s135 = sphi 0, %s119
  $region4: #{decoder_block_forward.1} parent=0 // loop_header_branch
    %14 = sbr.rel (%p12) target = $region8
  $region5: #{decoder_block_forward.1} parent=0 // loop_body
    %s16 = ssub.s32 %s11, 1
    %s17 = ssub.s32 %s11, 2
    %s18 = sadd.s32 %s11, 1
    %s19 = ssub.s32 %s11, %s18
    %p20 = scmp.eq.s32.totalorder %s19, 0
    %s22 = sadd.s32 %s21, 1
    %s23 = scalar_select %p20, %s21, %s22
    %p26 = pneg %p20
    %p27 = scmp.eq.s32.totalorder %s11, 1
    %p28 = por %p26, %p27
    %p29 = scmp.ne.s32.totalorder %s21, %s24
    %p30 = scmp.eq.s32.totalorder %s11, 0
    %p31 = por %p29, %p30
    %p32 = scmp.ne.s32.totalorder %s21, %s24
    %p33 = scmp.eq.s32.totalorder %s16, 1
    %p34 = por %p32, %p33
    %p35 = scmp.ne.s32.totalorder %s24, %s25
    %p36 = scmp.eq.s32.totalorder %s16, 0
    %p37 = por %p35, %p36
    %p38 = scmp.ne.s32.totalorder %s24, %s25
    %p39 = scmp.eq.s32.totalorder %s17, 1
    %p40 = por %p38, %p39
    %p42 = scmp.ne.s32.totalorder %s25, %s41
    %p43 = scmp.eq.s32.totalorder %s17, 0
    %p44 = por %p42, %p43
    %s46 = sadd.s32 %s45, 1
    %p49 = scmp.eq.s32.totalorder %s11, 1
    %p50 = scmp.ne.s32.totalorder %s45, %s47
    %p51 = scmp.eq.s32.totalorder %s11, 0
    %p52 = por %p50, %p51
    %p53 = scmp.ne.s32.totalorder %s45, %s47
    %p54 = scmp.eq.s32.totalorder %s16, 1
    %p55 = por %p53, %p54
    %p56 = scmp.ne.s32.totalorder %s47, %s48
    %p57 = scmp.eq.s32.totalorder %s16, 0
    %p58 = por %p56, %p57
    %p59 = scmp.ne.s32.totalorder %s47, %s48
    %p60 = scmp.eq.s32.totalorder %s17, 1
    %p61 = por %p59, %p60
    %p63 = scmp.ne.s32.totalorder %s48, %s62
    %p64 = scmp.eq.s32.totalorder %s17, 0
    %p65 = por %p63, %p64
    %s67 = sadd.s32 %s66, 1
    %p70 = scmp.eq.s32.totalorder %s11, 1
    %p71 = scmp.ne.s32.totalorder %s66, %s68
    %p72 = scmp.eq.s32.totalorder %s11, 0
    %p73 = por %p71, %p72
    %p74 = scmp.ne.s32.totalorder %s66, %s68
    %p75 = scmp.eq.s32.totalorder %s16, 1
    %p76 = por %p74, %p75
    %p77 = scmp.ne.s32.totalorder %s68, %s69
    %p78 = scmp.eq.s32.totalorder %s16, 0
    %p79 = por %p77, %p78
    %p80 = scmp.ne.s32.totalorder %s68, %s69
    %p81 = scmp.eq.s32.totalorder %s17, 1
    %p82 = por %p80, %p81
    %p84 = scmp.ne.s32.totalorder %s69, %s83
    %p85 = scmp.eq.s32.totalorder %s17, 0
    %p86 = por %p84, %p85
    %s87 = ssub.s32 %s11, %s18
    %p88 = scmp.eq.s32.totalorder %s87, 0
    %s90 = sadd.s32 %s89, 1
    %s91 = scalar_select %p88, %s89, %s90
    %p94 = pneg %p88
    %p95 = scmp.eq.s32.totalorder %s11, 1
    %p96 = por %p94, %p95
    %p97 = scmp.ne.s32.totalorder %s89, %s92
    %p98 = scmp.eq.s32.totalorder %s11, 0
    %p99 = por %p97, %p98
    %p100 = scmp.ne.s32.totalorder %s89, %s92
    %p101 = scmp.eq.s32.totalorder %s16, 1
    %p102 = por %p100, %p101
    %p103 = scmp.ne.s32.totalorder %s92, %s93
    %p104 = scmp.eq.s32.totalorder %s16, 0
    %p105 = por %p103, %p104
    %p106 = scmp.ne.s32.totalorder %s92, %s93
    %p107 = scmp.eq.s32.totalorder %s17, 1
    %p108 = por %p106, %p107
    %p110 = scmp.ne.s32.totalorder %s93, %s109
    %p111 = scmp.eq.s32.totalorder %s17, 0
    %p112 = por %p110, %p111
    %s113 = ssub.s32 %s11, %s18
    %p114 = scmp.eq.s32.totalorder %s113, 0
    %s116 = sadd.s32 %s115, 1
    %s117 = scalar_select %p114, %s115, %s116
    %p120 = pneg %p114
    %p121 = scmp.eq.s32.totalorder %s11, 1
    %p122 = por %p120, %p121
    %p123 = scmp.ne.s32.totalorder %s115, %s118
    %p124 = scmp.eq.s32.totalorder %s11, 0
    %p125 = por %p123, %p124
    %p126 = scmp.ne.s32.totalorder %s115, %s118
    %p127 = scmp.eq.s32.totalorder %s16, 1
    %p128 = por %p126, %p127
    %p129 = scmp.ne.s32.totalorder %s118, %s119
    %p130 = scmp.eq.s32.totalorder %s16, 0
    %p131 = por %p129, %p130
    %p132 = scmp.ne.s32.totalorder %s118, %s119
    %p133 = scmp.eq.s32.totalorder %s17, 1
    %p134 = por %p132, %p133
    %p136 = scmp.ne.s32.totalorder %s119, %s135
    %p137 = scmp.eq.s32.totalorder %s17, 0
    %p138 = por %p136, %p137
    %p139 = scmp.le.s32.totalorder 1, %s11
    %p140 = scmp.lt.s32.totalorder %s11, 3
    %p141 = pnand %p139, %p140
    %p142 = pneg %p141
    // Predicated region
    $region9: #{decoder_block_forward.1} parent=5 // pred_check
      _
    $region10: #{decoder_block_forward.1} parent=5 // pred_check_branch
      %144 = sbr.rel (%p141) target = $region12
    $region11: #{decoder_block_forward.1} parent=5 // pred_region
      %s145 = ssub.s32 %s11, 1
      // Predicated region
      $region13: #{decoder_block_forward.1} parent=11 // pred_check
        %p146 = pneg %p58
      $region14: #{decoder_block_forward.1} parent=11 // pred_check_branch
        %148 = sbr.rel (%p146) target = $region16
      $region15: #{decoder_block_forward.1} parent=11 // pred_region
        _
      $region16: #{decoder_block_forward.1} parent=11 // pred_fallthru
        _
      // Predicated region
      $region17: #{decoder_block_forward.1} parent=11 // pred_check
        %p149 = pneg %p79
      $region18: #{decoder_block_forward.1} parent=11 // pred_check_branch
        %151 = sbr.rel (%p149) target = $region20
      $region19: #{decoder_block_forward.1} parent=11 // pred_region
        _
      $region20: #{decoder_block_forward.1} parent=11 // pred_fallthru
        _
    $region12: #{decoder_block_forward.1} parent=5 // pred_fallthru
      _
    %p152 = scmp.lt.s32.totalorder %s11, 2
    // Predicated region
    $region21: #{decoder_block_forward.1} parent=5 // pred_check
      %p153 = pneg %p152
    $region22: #{decoder_block_forward.1} parent=5 // pred_check_branch
      %155 = sbr.rel (%p153) target = $region24
    $region23: #{decoder_block_forward.1} parent=5 // pred_region
      // Predicated region
      $region25: #{decoder_block_forward.1} parent=23 // pred_check
        %p156 = pneg %p31
      $region26: #{decoder_block_forward.1} parent=23 // pred_check_branch
        %158 = sbr.rel (%p156) target = $region28
      $region27: #{decoder_block_forward.1} parent=23 // pred_region
        %p159 = scmp.lt.s32.totalorder %s11, 1
        %s160 = scalar_select %p159, %s11, 1
        %s161 = smul.addr %s160, 32
        %s162 = smul.addr %s161, 8
        %s163 = scalar_lea.vmem %s0, %s162
      $region28: #{decoder_block_forward.1} parent=23 // pred_fallthru
        _
    $region24: #{decoder_block_forward.1} parent=5 // pred_fallthru
      _
    %p164 = scmp.le.s32.totalorder 1, %s11
    %p165 = scmp.lt.s32.totalorder %s11, 3
    %p166 = pnand %p164, %p165
    %p167 = pneg %p166
    // Predicated region
    $region29: #{decoder_block_forward.1} parent=5 // pred_check
      _
    $region30: #{decoder_block_forward.1} parent=5 // pred_check_branch
      %169 = sbr.rel (%p166) target = $region32
    $region31: #{decoder_block_forward.1} parent=5 // pred_region
      %s170 = ssub.s32 %s11, 1
      %p171 = scmp.lt.s32.totalorder %s16, 1
      %s172 = scalar_select %p171, %s16, 1
      %s173 = smul.addr %s172, 32
      %s174 = smul.addr %s173, 8
      %s175 = scalar_lea.vmem %s0, %s174
      %p176 = pneg %p37
      %p177 = pneg %p34
      %p178 = pneg %p58
      %p179 = pneg %p55
      %p180 = pneg %p79
      %p181 = pneg %p76
      %p182 = pneg %p105
      %p183 = pneg %p102
      %p184 = scmp.lt.s32.totalorder %s16, 1
      %s185 = scalar_select %p184, %s16, 1
      %s186 = smul.addr %s185, 32
      %s187 = smul.addr %s186, 8
      %s188 = scalar_lea.vmem %s3, %s187
      %p189 = pneg %p131
      %p190 = pneg %p128
      %s191 = smul.u32 4, %s16
      %p192 = scmp.lt.s32.totalorder %s191, 7
      %s193 = scalar_select %p192, %s191, 7
      %s194 = smul.addr %s193, 32
      %s195 = smul.addr %s194, 8
      %s196 = scalar_lea.vmem %s4, %s195
      %p197 = scmp.lt.s32.totalorder %s16, 1
      %s198 = scalar_select %p197, %s16, 1
      %s199 = smul.addr %s198, 32
      %s200 = smul.addr %s199, 8
      %s201 = scalar_lea.vmem %s0, %s200
      %p202 = scmp.lt.s32.totalorder %s16, 1
      %s203 = scalar_select %p202, %s16, 1
      %s204 = smul.addr %s203, 32
      %s205 = smul.addr %s204, 8
      %s206 = scalar_lea.vmem %s3, %s205
      %s207 = smul.u32 4, %s16
      %p208 = scmp.lt.s32.totalorder %s207, 7
      %s209 = scalar_select %p208, %s207, 7
      %s210 = smul.addr %s209, 32
      %s211 = smul.addr %s210, 8
      %s212 = scalar_lea.vmem %s4, %s211
      %s213 = smul.u32 4, %s16
      %v214 = vld [vmem:[%s201] sm:$0xff]
      %v215 = vld [vmem:[%s201 + $0x8] sm:$0xff]
      %v216 = vld [vmem:[%s201 + $0x10] sm:$0xff]
      %v217 = vld [vmem:[%s201 + $0x18] sm:$0xff]
      %v218 = vld [vmem:[%s201 + $0x20] sm:$0xff]
      %v219 = vld [vmem:[%s201 + $0x28] sm:$0xff]
      %v220 = vld [vmem:[%s201 + $0x30] sm:$0xff]
      %v221 = vld [vmem:[%s201 + $0x38] sm:$0xff]
      %v222 = vld [vmem:[%s201 + $0x40] sm:$0xff]
      %v223 = vld [vmem:[%s201 + $0x48] sm:$0xff]
      %v224 = vld [vmem:[%s201 + $0x50] sm:$0xff]
      %v225 = vld [vmem:[%s201 + $0x58] sm:$0xff]
      %v226 = vld [vmem:[%s201 + $0x60] sm:$0xff]
      %v227 = vld [vmem:[%s201 + $0x68] sm:$0xff]
      %v228 = vld [vmem:[%s201 + $0x70] sm:$0xff]
      %v229 = vld [vmem:[%s201 + $0x78] sm:$0xff]
      %v230 = vld [vmem:[%s201 + $0x80] sm:$0xff]
      %v231 = vld [vmem:[%s201 + $0x88] sm:$0xff]
      %v232 = vld [vmem:[%s201 + $0x90] sm:$0xff]
      %v233 = vld [vmem:[%s201 + $0x98] sm:$0xff]
      %v234 = vld [vmem:[%s201 + $0xa0] sm:$0xff]
      %v235 = vld [vmem:[%s201 + $0xa8] sm:$0xff]
      %v236 = vld [vmem:[%s201 + $0xb0] sm:$0xff]
      %v237 = vld [vmem:[%s201 + $0xb8] sm:$0xff]
      %v238 = vld [vmem:[%s201 + $0xc0] sm:$0xff]
      %v239 = vld [vmem:[%s201 + $0xc8] sm:$0xff]
      %v240 = vld [vmem:[%s201 + $0xd0] sm:$0xff]
      %v241 = vld [vmem:[%s201 + $0xd8] sm:$0xff]
      %v242 = vld [vmem:[%s201 + $0xe0] sm:$0xff]
      %v243 = vld [vmem:[%s201 + $0xe8] sm:$0xff]
      %v244 = vld [vmem:[%s201 + $0xf0] sm:$0xff]
      %v245 = vld [vmem:[%s201 + $0xf8] sm:$0xff]
      %v246 = vpack.c.bf16 %v215, %v214
      %v247 = vpack.c.bf16 %v217, %v216
      %v248 = vpack.c.bf16 %v219, %v218
      %v249 = vpack.c.bf16 %v221, %v220
      %v250 = vpack.c.bf16 %v223, %v222
      %v251 = vpack.c.bf16 %v225, %v224
      %v252 = vpack.c.bf16 %v227, %v226
      %v253 = vpack.c.bf16 %v229, %v228
      %v254 = vpack.c.bf16 %v231, %v230
      %v255 = vpack.c.bf16 %v233, %v232
      %v256 = vpack.c.bf16 %v235, %v234
      %v257 = vpack.c.bf16 %v237, %v236
      %v258 = vpack.c.bf16 %v239, %v238
      %v259 = vpack.c.bf16 %v241, %v240
      %v260 = vpack.c.bf16 %v243, %v242
      %v261 = vpack.c.bf16 %v245, %v244
      %v262 = vld [vmem:[%s1] sm:$0xf]
      %v263 = vld [vmem:[%s1 + $0x4] sm:$0xf]
      %v264 = vld [vmem:[%s1 + $0x8] sm:$0xf]
      %v265 = vld [vmem:[%s1 + $0xc] sm:$0xf]
      %v266 = vld [vmem:[%s1 + $0x10] sm:$0xf]
      %v267 = vld [vmem:[%s1 + $0x14] sm:$0xf]
      %v268 = vld [vmem:[%s1 + $0x18] sm:$0xf]
      %v269 = vld [vmem:[%s1 + $0x1c] sm:$0xf]
      %v270 = vld [vmem:[%s1 + $0x20] sm:$0xf]
      %v271 = vld [vmem:[%s1 + $0x24] sm:$0xf]
      %v272 = vld [vmem:[%s1 + $0x28] sm:$0xf]
      %v273 = vld [vmem:[%s1 + $0x2c] sm:$0xf]
      %v274 = vld [vmem:[%s1 + $0x30] sm:$0xf]
      %v275 = vld [vmem:[%s1 + $0x34] sm:$0xf]
      %v276 = vld [vmem:[%s1 + $0x38] sm:$0xf]
      %v277 = vld [vmem:[%s1 + $0x3c] sm:$0xf]
      %v278 = vld [vmem:[%s2] sm:$0x1]
      %v280 = vperm.slane %v278, 0
      %v298 = vunpack.c.l.b16 %v262
      %v299 = vunpack.c.l.b16 %v263
      %v300 = vunpack.c.l.b16 %v264
      %v301 = vunpack.c.l.b16 %v265
      %v302 = vunpack.c.l.b16 %v266
      %v303 = vunpack.c.l.b16 %v267
      %v304 = vunpack.c.l.b16 %v268
      %v305 = vunpack.c.l.b16 %v269
      %v306 = vunpack.c.l.b16 %v270
      %v307 = vunpack.c.l.b16 %v271
      %v308 = vunpack.c.l.b16 %v272
      %v309 = vunpack.c.l.b16 %v273
      %v310 = vunpack.c.l.b16 %v274
      %v311 = vunpack.c.l.b16 %v275
      %v312 = vunpack.c.l.b16 %v276
      %v313 = vunpack.c.l.b16 %v277
      %v314 = vpack.c.b16 %v299, %v298
      %v315 = vpack.c.b16 %v301, %v300
      %v316 = vpack.c.b16 %v303, %v302
      %v317 = vpack.c.b16 %v305, %v304
      %v318 = vpack.c.b16 %v307, %v306
      %v319 = vpack.c.b16 %v309, %v308
      %v320 = vpack.c.b16 %v311, %v310
      %v321 = vpack.c.b16 %v313, %v312
      %330 = vmatpush.bf16.msra.mxu0 %v321
      %331 = vmatpush.bf16.msra.mxu0 %v320
      %332 = vmatpush.bf16.msra.mxu0 %v319
      %333 = vmatpush.bf16.msra.mxu0 %v318
      %334 = vmatpush.bf16.msra.mxu0 %v317
      %335 = vmatpush.bf16.msra.mxu0 %v316
      %336 = vmatpush.bf16.msra.mxu0 %v315
      %337 = vmatpush.bf16.msra.mxu0 %v314
      %338 = vmatmul.bf16.gmra.mxu0 %v246
      %v339 = vpop.f32.mrf.mxu0
      %v340 = vadd.f32 %v280, %v339
      %v341 = vpop.f32.mrf.mxu0
      %v342 = vadd.f32 %v280, %v341
      %343 = vmatmul.bf16.gmra.mxu0 %v247
      %v344 = vpop.f32.mrf.mxu0
      %v345 = vadd.f32 %v280, %v344
      %v346 = vpop.f32.mrf.mxu0
      %v347 = vadd.f32 %v280, %v346
      %348 = vmatmul.bf16.gmra.mxu0 %v248
      %v349 = vpop.f32.mrf.mxu0
      %v350 = vadd.f32 %v280, %v349
      %v351 = vpop.f32.mrf.mxu0
      %v352 = vadd.f32 %v280, %v351
      %353 = vmatmul.bf16.gmra.mxu0 %v249
      %v354 = vpop.f32.mrf.mxu0
      %v355 = vadd.f32 %v280, %v354
      %v356 = vpop.f32.mrf.mxu0
      %v357 = vadd.f32 %v280, %v356
      %358 = vmatmul.bf16.gmra.mxu0 %v250
      %v359 = vpop.f32.mrf.mxu0
      %v360 = vadd.f32 %v280, %v359
      %v361 = vpop.f32.mrf.mxu0
      %v362 = vadd.f32 %v280, %v361
      %363 = vmatmul.bf16.gmra.mxu0 %v251
      %v364 = vpop.f32.mrf.mxu0
      %v365 = vadd.f32 %v280, %v364
      %v366 = vpop.f32.mrf.mxu0
      %v367 = vadd.f32 %v280, %v366
      %368 = vmatmul.bf16.gmra.mxu0 %v252
      %v369 = vpop.f32.mrf.mxu0
      %v370 = vadd.f32 %v280, %v369
      %v371 = vpop.f32.mrf.mxu0
      %v372 = vadd.f32 %v280, %v371
      %373 = vmatmul.bf16.gmra.mxu0 %v253
      %v374 = vpop.f32.mrf.mxu0
      %v375 = vadd.f32 %v280, %v374
      %v376 = vpop.f32.mrf.mxu0
      %v377 = vadd.f32 %v280, %v376
      %378 = vmatmul.bf16.gmra.mxu0 %v254
      %v379 = vpop.f32.mrf.mxu0
      %v380 = vadd.f32 %v280, %v379
      %v381 = vpop.f32.mrf.mxu0
      %v382 = vadd.f32 %v280, %v381
      %383 = vmatmul.bf16.gmra.mxu0 %v255
      %v384 = vpop.f32.mrf.mxu0
      %v385 = vadd.f32 %v280, %v384
      %v386 = vpop.f32.mrf.mxu0
      %v387 = vadd.f32 %v280, %v386
      %388 = vmatmul.bf16.gmra.mxu0 %v256
      %v389 = vpop.f32.mrf.mxu0
      %v390 = vadd.f32 %v280, %v389
      %v391 = vpop.f32.mrf.mxu0
      %v392 = vadd.f32 %v280, %v391
      %393 = vmatmul.bf16.gmra.mxu0 %v257
      %v394 = vpop.f32.mrf.mxu0
      %v395 = vadd.f32 %v280, %v394
      %v396 = vpop.f32.mrf.mxu0
      %v397 = vadd.f32 %v280, %v396
      %398 = vmatmul.bf16.gmra.mxu0 %v258
      %v399 = vpop.f32.mrf.mxu0
      %v400 = vadd.f32 %v280, %v399
      %v401 = vpop.f32.mrf.mxu0
      %v402 = vadd.f32 %v280, %v401
      %403 = vmatmul.bf16.gmra.mxu0 %v259
      %v404 = vpop.f32.mrf.mxu0
      %v405 = vadd.f32 %v280, %v404
      %v406 = vpop.f32.mrf.mxu0
      %v407 = vadd.f32 %v280, %v406
      %408 = vmatmul.bf16.gmra.mxu0 %v260
      %v409 = vpop.f32.mrf.mxu0
      %v410 = vadd.f32 %v280, %v409
      %v411 = vpop.f32.mrf.mxu0
      %v412 = vadd.f32 %v280, %v411
      %413 = vmatmul.bf16.gmra.mxu0 %v261
      %v414 = vpop.f32.mrf.mxu0
      %v415 = vadd.f32 %v280, %v414
      %v416 = vpop.f32.mrf.mxu0
      %v417 = vadd.f32 %v280, %v416
      %418 = vdwg.mxu0
      %419 = vst [vmem:[%s206] sm:$0xff] %v340
      %420 = vst [vmem:[%s206 + $0x8] sm:$0xff] %v342
      %421 = vst [vmem:[%s206 + $0x10] sm:$0xff] %v345
      %422 = vst [vmem:[%s206 + $0x18] sm:$0xff] %v347
      %423 = vst [vmem:[%s206 + $0x20] sm:$0xff] %v350
      %424 = vst [vmem:[%s206 + $0x28] sm:$0xff] %v352
      %425 = vst [vmem:[%s206 + $0x30] sm:$0xff] %v355
      %426 = vst [vmem:[%s206 + $0x38] sm:$0xff] %v357
      %427 = vst [vmem:[%s206 + $0x40] sm:$0xff] %v360
      %428 = vst [vmem:[%s206 + $0x48] sm:$0xff] %v362
      %429 = vst [vmem:[%s206 + $0x50] sm:$0xff] %v365
      %430 = vst [vmem:[%s206 + $0x58] sm:$0xff] %v367
      %431 = vst [vmem:[%s206 + $0x60] sm:$0xff] %v370
      %432 = vst [vmem:[%s206 + $0x68] sm:$0xff] %v372
      %433 = vst [vmem:[%s206 + $0x70] sm:$0xff] %v375
      %434 = vst [vmem:[%s206 + $0x78] sm:$0xff] %v377
      %435 = vst [vmem:[%s206 + $0x80] sm:$0xff] %v380
      %436 = vst [vmem:[%s206 + $0x88] sm:$0xff] %v382
      %437 = vst [vmem:[%s206 + $0x90] sm:$0xff] %v385
      %438 = vst [vmem:[%s206 + $0x98] sm:$0xff] %v387
      %439 = vst [vmem:[%s206 + $0xa0] sm:$0xff] %v390
      %440 = vst [vmem:[%s206 + $0xa8] sm:$0xff] %v392
      %441 = vst [vmem:[%s206 + $0xb0] sm:$0xff] %v395
      %442 = vst [vmem:[%s206 + $0xb8] sm:$0xff] %v397
      %443 = vst [vmem:[%s206 + $0xc0] sm:$0xff] %v400
      %444 = vst [vmem:[%s206 + $0xc8] sm:$0xff] %v402
      %445 = vst [vmem:[%s206 + $0xd0] sm:$0xff] %v405
      %446 = vst [vmem:[%s206 + $0xd8] sm:$0xff] %v407
      %447 = vst [vmem:[%s206 + $0xe0] sm:$0xff] %v410
      %448 = vst [vmem:[%s206 + $0xe8] sm:$0xff] %v412
      %449 = vst [vmem:[%s206 + $0xf0] sm:$0xff] %v415
      %450 = vst [vmem:[%s206 + $0xf8] sm:$0xff] %v417
      %v451 = vmul.f32 %v340, 0.25
      %v452 = vmul.f32 %v342, 0.25
      %v453 = vmul.f32 %v345, 0.25
      %v454 = vmul.f32 %v347, 0.25
      %v455 = vmul.f32 %v350, 0.25
      %v456 = vmul.f32 %v352, 0.25
      %v457 = vmul.f32 %v355, 0.25
      %v458 = vmul.f32 %v357, 0.25
      %v459 = vmul.f32 %v360, 0.25
      %v460 = vmul.f32 %v362, 0.25
      %v461 = vmul.f32 %v365, 0.25
      %v462 = vmul.f32 %v367, 0.25
      %v463 = vmul.f32 %v370, 0.25
      %v464 = vmul.f32 %v372, 0.25
      %v465 = vmul.f32 %v375, 0.25
      %v466 = vmul.f32 %v377, 0.25
      %v467 = vmul.f32 %v380, 0.25
      %v468 = vmul.f32 %v382, 0.25
      %v469 = vmul.f32 %v385, 0.25
      %v470 = vmul.f32 %v387, 0.25
      %v471 = vmul.f32 %v390, 0.25
      %v472 = vmul.f32 %v392, 0.25
      %v473 = vmul.f32 %v395, 0.25
      %v474 = vmul.f32 %v397, 0.25
      %v475 = vmul.f32 %v400, 0.25
      %v476 = vmul.f32 %v402, 0.25
      %v477 = vmul.f32 %v405, 0.25
      %v478 = vmul.f32 %v407, 0.25
      %v479 = vmul.f32 %v410, 0.25
      %v480 = vmul.f32 %v412, 0.25
      %v481 = vmul.f32 %v340, 0.75
      %v482 = vmul.f32 %v342, 0.75
      %v483 = vmul.f32 %v345, 0.75
      %v484 = vmul.f32 %v347, 0.75
      %v485 = vmul.f32 %v350, 0.75
      %v486 = vmul.f32 %v352, 0.75
      %v487 = vmul.f32 %v355, 0.75
      %v488 = vmul.f32 %v357, 0.75
      %v489 = vmul.f32 %v360, 0.75
      %v490 = vmul.f32 %v362, 0.75
      %v491 = vmul.f32 %v365, 0.75
      %v492 = vmul.f32 %v367, 0.75
      %v493 = vmul.f32 %v370, 0.75
      %v494 = vmul.f32 %v372, 0.75
      %v495 = vmul.f32 %v375, 0.75
      %v496 = vmul.f32 %v377, 0.75
      %v497 = vmul.f32 %v380, 0.75
      %v498 = vmul.f32 %v382, 0.75
      %v499 = vmul.f32 %v385, 0.75
      %v500 = vmul.f32 %v387, 0.75
      %v501 = vmul.f32 %v390, 0.75
      %v502 = vmul.f32 %v392, 0.75
      %v503 = vmul.f32 %v395, 0.75
      %v504 = vmul.f32 %v397, 0.75
      %v505 = vmul.f32 %v400, 0.75
      %v506 = vmul.f32 %v402, 0.75
      %v507 = vmul.f32 %v405, 0.75
      %v508 = vmul.f32 %v407, 0.75
      %v509 = vmul.f32 %v410, 0.75
      %v510 = vmul.f32 %v412, 0.75
      %v511 = vmul.f32 %v415, 0.75
      %v512 = vmul.f32 %v417, 0.75
      %v513 = vadd.f32 %v451, %v481
      %v514 = vadd.f32 %v452, %v482
      %v515 = vadd.f32 %v451, %v483
      %v516 = vadd.f32 %v452, %v484
      %v517 = vadd.f32 %v453, %v485
      %v518 = vadd.f32 %v454, %v486
      %v519 = vadd.f32 %v455, %v487
      %v520 = vadd.f32 %v456, %v488
      %v521 = vadd.f32 %v457, %v489
      %v522 = vadd.f32 %v458, %v490
      %v523 = vadd.f32 %v459, %v491
      %v524 = vadd.f32 %v460, %v492
      %v525 = vadd.f32 %v461, %v493
      %v526 = vadd.f32 %v462, %v494
      %v527 = vadd.f32 %v463, %v495
      %v528 = vadd.f32 %v464, %v496
      %v529 = vadd.f32 %v465, %v497
      %v530 = vadd.f32 %v466, %v498
      %v531 = vadd.f32 %v467, %v499
      %v532 = vadd.f32 %v468, %v500
      %v533 = vadd.f32 %v469, %v501
      %v534 = vadd.f32 %v470, %v502
      %v535 = vadd.f32 %v471, %v503
      %v536 = vadd.f32 %v472, %v504
      %v537 = vadd.f32 %v473, %v505
      %v538 = vadd.f32 %v474, %v506
      %v539 = vadd.f32 %v475, %v507
      %v540 = vadd.f32 %v476, %v508
      %v541 = vadd.f32 %v477, %v509
      %v542 = vadd.f32 %v478, %v510
      %v543 = vadd.f32 %v479, %v511
      %v544 = vadd.f32 %v480, %v512
      %v545 = vmul.f32 %v415, 0.25
      %v546 = vmul.f32 %v417, 0.25
      %v547 = vadd.f32 %v481, %v453
      %v548 = vadd.f32 %v482, %v454
      %v549 = vadd.f32 %v483, %v455
      %v550 = vadd.f32 %v484, %v456
      %v551 = vadd.f32 %v485, %v457
      %v552 = vadd.f32 %v486, %v458
      %v553 = vadd.f32 %v487, %v459
      %v554 = vadd.f32 %v488, %v460
      %v555 = vadd.f32 %v489, %v461
      %v556 = vadd.f32 %v490, %v462
      %v557 = vadd.f32 %v491, %v463
      %v558 = vadd.f32 %v492, %v464
      %v559 = vadd.f32 %v493, %v465
      %v560 = vadd.f32 %v494, %v466
      %v561 = vadd.f32 %v495, %v467
      %v562 = vadd.f32 %v496, %v468
      %v563 = vadd.f32 %v497, %v469
      %v564 = vadd.f32 %v498, %v470
      %v565 = vadd.f32 %v499, %v471
      %v566 = vadd.f32 %v500, %v472
      %v567 = vadd.f32 %v501, %v473
      %v568 = vadd.f32 %v502, %v474
      %v569 = vadd.f32 %v503, %v475
      %v570 = vadd.f32 %v504, %v476
      %v571 = vadd.f32 %v505, %v477
      %v572 = vadd.f32 %v506, %v478
      %v573 = vadd.f32 %v507, %v479
      %v574 = vadd.f32 %v508, %v480
      %v575 = vadd.f32 %v509, %v545
      %v576 = vadd.f32 %v510, %v546
      %v577 = vadd.f32 %v511, %v545
      %v578 = vadd.f32 %v512, %v546
      %vm611 = vcmask 1040384
      %v612 = vrot.slane %v513, 7
      %v613 = vrot.slane %v514, 7
      %v614 = vsel %vm611, %v612, %v613
      %v615 = vrot.slane %v515, 7
      %v616 = vrot.slane %v516, 7
      %v617 = vsel %vm611, %v615, %v616
      %v618 = vrot.slane %v517, 7
      %v619 = vrot.slane %v518, 7
      %v620 = vsel %vm611, %v618, %v619
      %v621 = vrot.slane %v519, 7
      %v622 = vrot.slane %v520, 7
      %v623 = vsel %vm611, %v621, %v622
      %v624 = vrot.slane %v521, 7
      %v625 = vrot.slane %v522, 7
      %v626 = vsel %vm611, %v624, %v625
      %v627 = vrot.slane %v523, 7
      %v628 = vrot.slane %v524, 7
      %v629 = vsel %vm611, %v627, %v628
      %v630 = vrot.slane %v525, 7
      %v631 = vrot.slane %v526, 7
      %v632 = vsel %vm611, %v630, %v631
      %v633 = vrot.slane %v527, 7
      %v634 = vrot.slane %v528, 7
      %v635 = vsel %vm611, %v633, %v634
      %v636 = vrot.slane %v529, 7
      %v637 = vrot.slane %v530, 7
      %v638 = vsel %vm611, %v636, %v637
      %v639 = vrot.slane %v531, 7
      %v640 = vrot.slane %v532, 7
      %v641 = vsel %vm611, %v639, %v640
      %v642 = vrot.slane %v533, 7
      %v643 = vrot.slane %v534, 7
      %v644 = vsel %vm611, %v642, %v643
      %v645 = vrot.slane %v535, 7
      %v646 = vrot.slane %v536, 7
      %v647 = vsel %vm611, %v645, %v646
      %v648 = vrot.slane %v537, 7
      %v649 = vrot.slane %v538, 7
      %v650 = vsel %vm611, %v648, %v649
      %v651 = vrot.slane %v539, 7
      %v652 = vrot.slane %v540, 7
      %v653 = vsel %vm611, %v651, %v652
      %v654 = vrot.slane %v541, 7
      %v655 = vrot.slane %v542, 7
      %v656 = vsel %vm611, %v654, %v655
      %v657 = vrot.slane %v543, 7
      %v658 = vrot.slane %v544, 7
      %v659 = vsel %vm611, %v657, %v658
      %v692 = vsel %vm611, %v513, %v612
      %v693 = vsel %vm611, %v515, %v615
      %v694 = vsel %vm611, %v517, %v618
      %v695 = vsel %vm611, %v519, %v621
      %v696 = vsel %vm611, %v521, %v624
      %v697 = vsel %vm611, %v523, %v627
      %v698 = vsel %vm611, %v525, %v630
      %v699 = vsel %vm611, %v527, %v633
      %v700 = vsel %vm611, %v529, %v636
      %v701 = vsel %vm611, %v531, %v639
      %v702 = vsel %vm611, %v533, %v642
      %v703 = vsel %vm611, %v535, %v645
      %v704 = vsel %vm611, %v537, %v648
      %v705 = vsel %vm611, %v539, %v651
      %v706 = vsel %vm611, %v541, %v654
      %v707 = vsel %vm611, %v543, %v657
      %vm708 = vcmask 1046528
      %v709 = vrot.slane %v513, 1
      %v710 = vrot.slane %v514, 1
      %v711 = vsel %vm708, %v709, %v710
      %v712 = vrot.slane %v515, 1
      %v713 = vrot.slane %v516, 1
      %v714 = vsel %vm708, %v712, %v713
      %v715 = vrot.slane %v517, 1
      %v716 = vrot.slane %v518, 1
      %v717 = vsel %vm708, %v715, %v716
      %v718 = vrot.slane %v519, 1
      %v719 = vrot.slane %v520, 1
      %v720 = vsel %vm708, %v718, %v719
      %v721 = vrot.slane %v521, 1
      %v722 = vrot.slane %v522, 1
      %v723 = vsel %vm708, %v721, %v722
      %v724 = vrot.slane %v523, 1
      %v725 = vrot.slane %v524, 1
      %v726 = vsel %vm708, %v724, %v725
      %v727 = vrot.slane %v525, 1
      %v728 = vrot.slane %v526, 1
      %v729 = vsel %vm708, %v727, %v728
      %v730 = vrot.slane %v527, 1
      %v731 = vrot.slane %v528, 1
      %v732 = vsel %vm708, %v730, %v731
      %v733 = vrot.slane %v529, 1
      %v734 = vrot.slane %v530, 1
      %v735 = vsel %vm708, %v733, %v734
      %v736 = vrot.slane %v531, 1
      %v737 = vrot.slane %v532, 1
      %v738 = vsel %vm708, %v736, %v737
      %v739 = vrot.slane %v533, 1
      %v740 = vrot.slane %v534, 1
      %v741 = vsel %vm708, %v739, %v740
      %v742 = vrot.slane %v535, 1
      %v743 = vrot.slane %v536, 1
      %v744 = vsel %vm708, %v742, %v743
      %v745 = vrot.slane %v537, 1
      %v746 = vrot.slane %v538, 1
      %v747 = vsel %vm708, %v745, %v746
      %v748 = vrot.slane %v539, 1
      %v749 = vrot.slane %v540, 1
      %v750 = vsel %vm708, %v748, %v749
      %v751 = vrot.slane %v541, 1
      %v752 = vrot.slane %v542, 1
      %v753 = vsel %vm708, %v751, %v752
      %v754 = vrot.slane %v543, 1
      %v755 = vrot.slane %v544, 1
      %v756 = vsel %vm708, %v754, %v755
      %v789 = vsel %vm708, %v710, %v514
      %v790 = vsel %vm708, %v713, %v516
      %v791 = vsel %vm708, %v716, %v518
      %v792 = vsel %vm708, %v719, %v520
      %v793 = vsel %vm708, %v722, %v522
      %v794 = vsel %vm708, %v725, %v524
      %v795 = vsel %vm708, %v728, %v526
      %v796 = vsel %vm708, %v731, %v528
      %v797 = vsel %vm708, %v734, %v530
      %v798 = vsel %vm708, %v737, %v532
      %v799 = vsel %vm708, %v740, %v534
      %v800 = vsel %vm708, %v743, %v536
      %v801 = vsel %vm708, %v746, %v538
      %v802 = vsel %vm708, %v749, %v540
      %v803 = vsel %vm708, %v752, %v542
      %v804 = vsel %vm708, %v755, %v544
      %v805 = vmul.f32 %v692, 0.25
      %v806 = vmul.f32 %v614, 0.25
      %v807 = vmul.f32 %v693, 0.25
      %v808 = vmul.f32 %v617, 0.25
      %v809 = vmul.f32 %v694, 0.25
      %v810 = vmul.f32 %v620, 0.25
      %v811 = vmul.f32 %v695, 0.25
      %v812 = vmul.f32 %v623, 0.25
      %v813 = vmul.f32 %v696, 0.25
      %v814 = vmul.f32 %v626, 0.25
      %v815 = vmul.f32 %v697, 0.25
      %v816 = vmul.f32 %v629, 0.25
      %v817 = vmul.f32 %v698, 0.25
      %v818 = vmul.f32 %v632, 0.25
      %v819 = vmul.f32 %v699, 0.25
      %v820 = vmul.f32 %v635, 0.25
      %v821 = vmul.f32 %v700, 0.25
      %v822 = vmul.f32 %v638, 0.25
      %v823 = vmul.f32 %v701, 0.25
      %v824 = vmul.f32 %v641, 0.25
      %v825 = vmul.f32 %v702, 0.25
      %v826 = vmul.f32 %v644, 0.25
      %v827 = vmul.f32 %v703, 0.25
      %v828 = vmul.f32 %v647, 0.25
      %v829 = vmul.f32 %v704, 0.25
      %v830 = vmul.f32 %v650, 0.25
      %v831 = vmul.f32 %v705, 0.25
      %v832 = vmul.f32 %v653, 0.25
      %v833 = vmul.f32 %v706, 0.25
      %v834 = vmul.f32 %v656, 0.25
      %v835 = vmul.f32 %v707, 0.25
      %v836 = vmul.f32 %v659, 0.25
      %v837 = vmul.f32 %v513, 0.75
      %v838 = vmul.f32 %v514, 0.75
      %v839 = vmul.f32 %v515, 0.75
      %v840 = vmul.f32 %v516, 0.75
      %v841 = vmul.f32 %v517, 0.75
      %v842 = vmul.f32 %v518, 0.75
      %v843 = vmul.f32 %v519, 0.75
      %v844 = vmul.f32 %v520, 0.75
      %v845 = vmul.f32 %v521, 0.75
      %v846 = vmul.f32 %v522, 0.75
      %v847 = vmul.f32 %v523, 0.75
      %v848 = vmul.f32 %v524, 0.75
      %v849 = vmul.f32 %v525, 0.75
      %v850 = vmul.f32 %v526, 0.75
      %v851 = vmul.f32 %v527, 0.75
      %v852 = vmul.f32 %v528, 0.75
      %v853 = vmul.f32 %v529, 0.75
      %v854 = vmul.f32 %v530, 0.75
      %v855 = vmul.f32 %v531, 0.75
      %v856 = vmul.f32 %v532, 0.75
      %v857 = vmul.f32 %v533, 0.75
      %v858 = vmul.f32 %v534, 0.75
      %v859 = vmul.f32 %v535, 0.75
      %v860 = vmul.f32 %v536, 0.75
      %v861 = vmul.f32 %v537, 0.75
      %v862 = vmul.f32 %v538, 0.75
      %v863 = vmul.f32 %v539, 0.75
      %v864 = vmul.f32 %v540, 0.75
      %v865 = vmul.f32 %v541, 0.75
      %v866 = vmul.f32 %v542, 0.75
      %v867 = vmul.f32 %v543, 0.75
      %v868 = vmul.f32 %v544, 0.75
      %v869 = vadd.f32 %v805, %v837
      %v870 = vadd.f32 %v806, %v838
      %v871 = vadd.f32 %v807, %v839
      %v872 = vadd.f32 %v808, %v840
      %v873 = vadd.f32 %v809, %v841
      %v874 = vadd.f32 %v810, %v842
      %v875 = vadd.f32 %v811, %v843
      %v876 = vadd.f32 %v812, %v844
      %v877 = vadd.f32 %v813, %v845
      %v878 = vadd.f32 %v814, %v846
      %v879 = vadd.f32 %v815, %v847
      %v880 = vadd.f32 %v816, %v848
      %v881 = vadd.f32 %v817, %v849
      %v882 = vadd.f32 %v818, %v850
      %v883 = vadd.f32 %v819, %v851
      %v884 = vadd.f32 %v820, %v852
      %v885 = vadd.f32 %v821, %v853
      %v886 = vadd.f32 %v822, %v854
      %v887 = vadd.f32 %v823, %v855
      %v888 = vadd.f32 %v824, %v856
      %v889 = vadd.f32 %v825, %v857
      %v890 = vadd.f32 %v826, %v858
      %v891 = vadd.f32 %v827, %v859
      %v892 = vadd.f32 %v828, %v860
      %v893 = vadd.f32 %v829, %v861
      %v894 = vadd.f32 %v830, %v862
      %v895 = vadd.f32 %v831, %v863
      %v896 = vadd.f32 %v832, %v864
      %v897 = vadd.f32 %v833, %v865
      %v898 = vadd.f32 %v834, %v866
      %v899 = vadd.f32 %v835, %v867
      %v900 = vadd.f32 %v836, %v868
      %v901 = vmul.f32 %v711, 0.25
      %v902 = vmul.f32 %v789, 0.25
      %v903 = vmul.f32 %v714, 0.25
      %v904 = vmul.f32 %v790, 0.25
      %v905 = vmul.f32 %v717, 0.25
      %v906 = vmul.f32 %v791, 0.25
      %v907 = vmul.f32 %v720, 0.25
      %v908 = vmul.f32 %v792, 0.25
      %v909 = vmul.f32 %v723, 0.25
      %v910 = vmul.f32 %v793, 0.25
      %v911 = vmul.f32 %v726, 0.25
      %v912 = vmul.f32 %v794, 0.25
      %v913 = vmul.f32 %v729, 0.25
      %v914 = vmul.f32 %v795, 0.25
      %v915 = vmul.f32 %v732, 0.25
      %v916 = vmul.f32 %v796, 0.25
      %v917 = vmul.f32 %v735, 0.25
      %v918 = vmul.f32 %v797, 0.25
      %v919 = vmul.f32 %v738, 0.25
      %v920 = vmul.f32 %v798, 0.25
      %v921 = vmul.f32 %v741, 0.25
      %v922 = vmul.f32 %v799, 0.25
      %v923 = vmul.f32 %v744, 0.25
      %v924 = vmul.f32 %v800, 0.25
      %v925 = vmul.f32 %v747, 0.25
      %v926 = vmul.f32 %v801, 0.25
      %v927 = vmul.f32 %v750, 0.25
      %v928 = vmul.f32 %v802, 0.25
      %v929 = vmul.f32 %v753, 0.25
      %v930 = vmul.f32 %v803, 0.25
      %v931 = vmul.f32 %v756, 0.25
      %v932 = vmul.f32 %v804, 0.25
      %v933 = vadd.f32 %v837, %v901
      %v934 = vadd.f32 %v838, %v902
      %v935 = vadd.f32 %v839, %v903
      %v936 = vadd.f32 %v840, %v904
      %v937 = vadd.f32 %v841, %v905
      %v938 = vadd.f32 %v842, %v906
      %v939 = vadd.f32 %v843, %v907
      %v940 = vadd.f32 %v844, %v908
      %v941 = vadd.f32 %v845, %v909
      %v942 = vadd.f32 %v846, %v910
      %v943 = vadd.f32 %v847, %v911
      %v944 = vadd.f32 %v848, %v912
      %v945 = vadd.f32 %v849, %v913
      %v946 = vadd.f32 %v850, %v914
      %v947 = vadd.f32 %v851, %v915
      %v948 = vadd.f32 %v852, %v916
      %v949 = vadd.f32 %v853, %v917
      %v950 = vadd.f32 %v854, %v918
      %v951 = vadd.f32 %v855, %v919
      %v952 = vadd.f32 %v856, %v920
      %v953 = vadd.f32 %v857, %v921
      %v954 = vadd.f32 %v858, %v922
      %v955 = vadd.f32 %v859, %v923
      %v956 = vadd.f32 %v860, %v924
      %v957 = vadd.f32 %v861, %v925
      %v958 = vadd.f32 %v862, %v926
      %v959 = vadd.f32 %v863, %v927
      %v960 = vadd.f32 %v864, %v928
      %v961 = vadd.f32 %v865, %v929
      %v962 = vadd.f32 %v866, %v930
      %v963 = vadd.f32 %v867, %v931
      %v964 = vadd.f32 %v868, %v932
      %v997 = vrot.slane %v547, 7
      %v998 = vrot.slane %v548, 7
      %v999 = vsel %vm611, %v997, %v998
      %v1000 = vrot.slane %v549, 7
      %v1001 = vrot.slane %v550, 7
      %v1002 = vsel %vm611, %v1000, %v1001
      %v1003 = vrot.slane %v551, 7
      %v1004 = vrot.slane %v552, 7
      %v1005 = vsel %vm611, %v1003, %v1004
      %v1006 = vrot.slane %v553, 7
      %v1007 = vrot.slane %v554, 7
      %v1008 = vsel %vm611, %v1006, %v1007
      %v1009 = vrot.slane %v555, 7
      %v1010 = vrot.slane %v556, 7
      %v1011 = vsel %vm611, %v1009, %v1010
      %v1012 = vrot.slane %v557, 7
      %v1013 = vrot.slane %v558, 7
      %v1014 = vsel %vm611, %v1012, %v1013
      %v1015 = vrot.slane %v559, 7
      %v1016 = vrot.slane %v560, 7
      %v1017 = vsel %vm611, %v1015, %v1016
      %v1018 = vrot.slane %v561, 7
      %v1019 = vrot.slane %v562, 7
      %v1020 = vsel %vm611, %v1018, %v1019
      %v1021 = vrot.slane %v563, 7
      %v1022 = vrot.slane %v564, 7
      %v1023 = vsel %vm611, %v1021, %v1022
      %v1024 = vrot.slane %v565, 7
      %v1025 = vrot.slane %v566, 7
      %v1026 = vsel %vm611, %v1024, %v1025
      %v1027 = vrot.slane %v567, 7
      %v1028 = vrot.slane %v568, 7
      %v1029 = vsel %vm611, %v1027, %v1028
      %v1030 = vrot.slane %v569, 7
      %v1031 = vrot.slane %v570, 7
      %v1032 = vsel %vm611, %v1030, %v1031
      %v1033 = vrot.slane %v571, 7
      %v1034 = vrot.slane %v572, 7
      %v1035 = vsel %vm611, %v1033, %v1034
      %v1036 = vrot.slane %v573, 7
      %v1037 = vrot.slane %v574, 7
      %v1038 = vsel %vm611, %v1036, %v1037
      %v1039 = vrot.slane %v575, 7
      %v1040 = vrot.slane %v576, 7
      %v1041 = vsel %vm611, %v1039, %v1040
      %v1042 = vrot.slane %v577, 7
      %v1043 = vrot.slane %v578, 7
      %v1044 = vsel %vm611, %v1042, %v1043
      %v1077 = vsel %vm611, %v547, %v997
      %v1078 = vsel %vm611, %v549, %v1000
      %v1079 = vsel %vm611, %v551, %v1003
      %v1080 = vsel %vm611, %v553, %v1006
      %v1081 = vsel %vm611, %v555, %v1009
      %v1082 = vsel %vm611, %v557, %v1012
      %v1083 = vsel %vm611, %v559, %v1015
      %v1084 = vsel %vm611, %v561, %v1018
      %v1085 = vsel %vm611, %v563, %v1021
      %v1086 = vsel %vm611, %v565, %v1024
      %v1087 = vsel %vm611, %v567, %v1027
      %v1088 = vsel %vm611, %v569, %v1030
      %v1089 = vsel %vm611, %v571, %v1033
      %v1090 = vsel %vm611, %v573, %v1036
      %v1091 = vsel %vm611, %v575, %v1039
      %v1092 = vsel %vm611, %v577, %v1042
      %v1093 = vrot.slane %v547, 1
      %v1094 = vrot.slane %v548, 1
      %v1095 = vsel %vm708, %v1093, %v1094
      %v1096 = vrot.slane %v549, 1
      %v1097 = vrot.slane %v550, 1
      %v1098 = vsel %vm708, %v1096, %v1097
      %v1099 = vrot.slane %v551, 1
      %v1100 = vrot.slane %v552, 1
      %v1101 = vsel %vm708, %v1099, %v1100
      %v1102 = vrot.slane %v553, 1
      %v1103 = vrot.slane %v554, 1
      %v1104 = vsel %vm708, %v1102, %v1103
      %v1105 = vrot.slane %v555, 1
      %v1106 = vrot.slane %v556, 1
      %v1107 = vsel %vm708, %v1105, %v1106
      %v1108 = vrot.slane %v557, 1
      %v1109 = vrot.slane %v558, 1
      %v1110 = vsel %vm708, %v1108, %v1109
      %v1111 = vrot.slane %v559, 1
      %v1112 = vrot.slane %v560, 1
      %v1113 = vsel %vm708, %v1111, %v1112
      %v1114 = vrot.slane %v561, 1
      %v1115 = vrot.slane %v562, 1
      %v1116 = vsel %vm708, %v1114, %v1115
      %v1117 = vrot.slane %v563, 1
      %v1118 = vrot.slane %v564, 1
      %v1119 = vsel %vm708, %v1117, %v1118
      %v1120 = vrot.slane %v565, 1
      %v1121 = vrot.slane %v566, 1
      %v1122 = vsel %vm708, %v1120, %v1121
      %v1123 = vrot.slane %v567, 1
      %v1124 = vrot.slane %v568, 1
      %v1125 = vsel %vm708, %v1123, %v1124
      %v1126 = vrot.slane %v569, 1
      %v1127 = vrot.slane %v570, 1
      %v1128 = vsel %vm708, %v1126, %v1127
      %v1129 = vrot.slane %v571, 1
      %v1130 = vrot.slane %v572, 1
      %v1131 = vsel %vm708, %v1129, %v1130
      %v1132 = vrot.slane %v573, 1
      %v1133 = vrot.slane %v574, 1
      %v1134 = vsel %vm708, %v1132, %v1133
      %v1135 = vrot.slane %v575, 1
      %v1136 = vrot.slane %v576, 1
      %v1137 = vsel %vm708, %v1135, %v1136
      %v1138 = vrot.slane %v577, 1
      %v1139 = vrot.slane %v578, 1
      %v1140 = vsel %vm708, %v1138, %v1139
      %v1173 = vsel %vm708, %v1094, %v548
      %v1174 = vsel %vm708, %v1097, %v550
      %v1175 = vsel %vm708, %v1100, %v552
      %v1176 = vsel %vm708, %v1103, %v554
      %v1177 = vsel %vm708, %v1106, %v556
      %v1178 = vsel %vm708, %v1109, %v558
      %v1179 = vsel %vm708, %v1112, %v560
      %v1180 = vsel %vm708, %v1115, %v562
      %v1181 = vsel %vm708, %v1118, %v564
      %v1182 = vsel %vm708, %v1121, %v566
      %v1183 = vsel %vm708, %v1124, %v568
      %v1184 = vsel %vm708, %v1127, %v570
      %v1185 = vsel %vm708, %v1130, %v572
      %v1186 = vsel %vm708, %v1133, %v574
      %v1187 = vsel %vm708, %v1136, %v576
      %v1188 = vsel %vm708, %v1139, %v578
      %v1189 = vmul.f32 %v1077, 0.25
      %v1190 = vmul.f32 %v999, 0.25
      %v1191 = vmul.f32 %v1078, 0.25
      %v1192 = vmul.f32 %v1002, 0.25
      %v1193 = vmul.f32 %v1079, 0.25
      %v1194 = vmul.f32 %v1005, 0.25
      %v1195 = vmul.f32 %v1080, 0.25
      %v1196 = vmul.f32 %v1008, 0.25
      %v1197 = vmul.f32 %v1081, 0.25
      %v1198 = vmul.f32 %v1011, 0.25
      %v1199 = vmul.f32 %v1082, 0.25
      %v1200 = vmul.f32 %v1014, 0.25
      %v1201 = vmul.f32 %v1083, 0.25
      %v1202 = vmul.f32 %v1017, 0.25
      %v1203 = vmul.f32 %v1084, 0.25
      %v1204 = vmul.f32 %v1020, 0.25
      %v1205 = vmul.f32 %v1085, 0.25
      %v1206 = vmul.f32 %v1023, 0.25
      %v1207 = vmul.f32 %v1086, 0.25
      %v1208 = vmul.f32 %v1026, 0.25
      %v1209 = vmul.f32 %v1087, 0.25
      %v1210 = vmul.f32 %v1029, 0.25
      %v1211 = vmul.f32 %v1088, 0.25
      %v1212 = vmul.f32 %v1032, 0.25
      %v1213 = vmul.f32 %v1089, 0.25
      %v1214 = vmul.f32 %v1035, 0.25
      %v1215 = vmul.f32 %v1090, 0.25
      %v1216 = vmul.f32 %v1038, 0.25
      %v1217 = vmul.f32 %v1091, 0.25
      %v1218 = vmul.f32 %v1041, 0.25
      %v1219 = vmul.f32 %v1092, 0.25
      %v1220 = vmul.f32 %v1044, 0.25
      %v1221 = vmul.f32 %v547, 0.75
      %v1222 = vmul.f32 %v548, 0.75
      %v1223 = vmul.f32 %v549, 0.75
      %v1224 = vmul.f32 %v550, 0.75
      %v1225 = vmul.f32 %v551, 0.75
      %v1226 = vmul.f32 %v552, 0.75
      %v1227 = vmul.f32 %v553, 0.75
      %v1228 = vmul.f32 %v554, 0.75
      %v1229 = vmul.f32 %v555, 0.75
      %v1230 = vmul.f32 %v556, 0.75
      %v1231 = vmul.f32 %v557, 0.75
      %v1232 = vmul.f32 %v558, 0.75
      %v1233 = vmul.f32 %v559, 0.75
      %v1234 = vmul.f32 %v560, 0.75
      %v1235 = vmul.f32 %v561, 0.75
      %v1236 = vmul.f32 %v562, 0.75
      %v1237 = vmul.f32 %v563, 0.75
      %v1238 = vmul.f32 %v564, 0.75
      %v1239 = vmul.f32 %v565, 0.75
      %v1240 = vmul.f32 %v566, 0.75
      %v1241 = vmul.f32 %v567, 0.75
      %v1242 = vmul.f32 %v568, 0.75
      %v1243 = vmul.f32 %v569, 0.75
      %v1244 = vmul.f32 %v570, 0.75
      %v1245 = vmul.f32 %v571, 0.75
      %v1246 = vmul.f32 %v572, 0.75
      %v1247 = vmul.f32 %v573, 0.75
      %v1248 = vmul.f32 %v574, 0.75
      %v1249 = vmul.f32 %v575, 0.75
      %v1250 = vmul.f32 %v576, 0.75
      %v1251 = vmul.f32 %v577, 0.75
      %v1252 = vmul.f32 %v578, 0.75
      %v1253 = vadd.f32 %v1189, %v1221
      %v1254 = vadd.f32 %v1190, %v1222
      %v1255 = vadd.f32 %v1191, %v1223
      %v1256 = vadd.f32 %v1192, %v1224
      %v1257 = vadd.f32 %v1193, %v1225
      %v1258 = vadd.f32 %v1194, %v1226
      %v1259 = vadd.f32 %v1195, %v1227
      %v1260 = vadd.f32 %v1196, %v1228
      %v1261 = vadd.f32 %v1197, %v1229
      %v1262 = vadd.f32 %v1198, %v1230
      %v1263 = vadd.f32 %v1199, %v1231
      %v1264 = vadd.f32 %v1200, %v1232
      %v1265 = vadd.f32 %v1201, %v1233
      %v1266 = vadd.f32 %v1202, %v1234
      %v1267 = vadd.f32 %v1203, %v1235
      %v1268 = vadd.f32 %v1204, %v1236
      %v1269 = vadd.f32 %v1205, %v1237
      %v1270 = vadd.f32 %v1206, %v1238
      %v1271 = vadd.f32 %v1207, %v1239
      %v1272 = vadd.f32 %v1208, %v1240
      %v1273 = vadd.f32 %v1209, %v1241
      %v1274 = vadd.f32 %v1210, %v1242
      %v1275 = vadd.f32 %v1211, %v1243
      %v1276 = vadd.f32 %v1212, %v1244
      %v1277 = vadd.f32 %v1213, %v1245
      %v1278 = vadd.f32 %v1214, %v1246
      %v1279 = vadd.f32 %v1215, %v1247
      %v1280 = vadd.f32 %v1216, %v1248
      %v1281 = vadd.f32 %v1217, %v1249
      %v1282 = vadd.f32 %v1218, %v1250
      %v1283 = vadd.f32 %v1219, %v1251
      %v1284 = vadd.f32 %v1220, %v1252
      %v1285 = vmul.f32 %v1095, 0.25
      %v1286 = vmul.f32 %v1173, 0.25
      %v1287 = vmul.f32 %v1098, 0.25
      %v1288 = vmul.f32 %v1174, 0.25
      %v1289 = vmul.f32 %v1101, 0.25
      %v1290 = vmul.f32 %v1175, 0.25
      %v1291 = vmul.f32 %v1104, 0.25
      %v1292 = vmul.f32 %v1176, 0.25
      %v1293 = vmul.f32 %v1107, 0.25
      %v1294 = vmul.f32 %v1177, 0.25
      %v1295 = vmul.f32 %v1110, 0.25
      %v1296 = vmul.f32 %v1178, 0.25
      %v1297 = vmul.f32 %v1113, 0.25
      %v1298 = vmul.f32 %v1179, 0.25
      %v1299 = vmul.f32 %v1116, 0.25
      %v1300 = vmul.f32 %v1180, 0.25
      %v1301 = vmul.f32 %v1119, 0.25
      %v1302 = vmul.f32 %v1181, 0.25
      %v1303 = vmul.f32 %v1122, 0.25
      %v1304 = vmul.f32 %v1182, 0.25
      %v1305 = vmul.f32 %v1125, 0.25
      %v1306 = vmul.f32 %v1183, 0.25
      %v1307 = vmul.f32 %v1128, 0.25
      %v1308 = vmul.f32 %v1184, 0.25
      %v1309 = vmul.f32 %v1131, 0.25
      %v1310 = vmul.f32 %v1185, 0.25
      %v1311 = vmul.f32 %v1134, 0.25
      %v1312 = vmul.f32 %v1186, 0.25
      %v1313 = vmul.f32 %v1137, 0.25
      %v1314 = vmul.f32 %v1187, 0.25
      %v1315 = vmul.f32 %v1140, 0.25
      %v1316 = vmul.f32 %v1188, 0.25
      %v1317 = vadd.f32 %v1221, %v1285
      %v1318 = vadd.f32 %v1222, %v1286
      %v1319 = vadd.f32 %v1223, %v1287
      %v1320 = vadd.f32 %v1224, %v1288
      %v1321 = vadd.f32 %v1225, %v1289
      %v1322 = vadd.f32 %v1226, %v1290
      %v1323 = vadd.f32 %v1227, %v1291
      %v1324 = vadd.f32 %v1228, %v1292
      %v1325 = vadd.f32 %v1229, %v1293
      %v1326 = vadd.f32 %v1230, %v1294
      %v1327 = vadd.f32 %v1231, %v1295
      %v1328 = vadd.f32 %v1232, %v1296
      %v1329 = vadd.f32 %v1233, %v1297
      %v1330 = vadd.f32 %v1234, %v1298
      %v1331 = vadd.f32 %v1235, %v1299
      %v1332 = vadd.f32 %v1236, %v1300
      %v1333 = vadd.f32 %v1237, %v1301
      %v1334 = vadd.f32 %v1238, %v1302
      %v1335 = vadd.f32 %v1239, %v1303
      %v1336 = vadd.f32 %v1240, %v1304
      %v1337 = vadd.f32 %v1241, %v1305
      %v1338 = vadd.f32 %v1242, %v1306
      %v1339 = vadd.f32 %v1243, %v1307
      %v1340 = vadd.f32 %v1244, %v1308
      %v1341 = vadd.f32 %v1245, %v1309
      %v1342 = vadd.f32 %v1246, %v1310
      %v1343 = vadd.f32 %v1247, %v1311
      %v1344 = vadd.f32 %v1248, %v1312
      %v1345 = vadd.f32 %v1249, %v1313
      %v1346 = vadd.f32 %v1250, %v1314
      %v1347 = vadd.f32 %v1251, %v1315
      %v1348 = vadd.f32 %v1252, %v1316
      %1349 = vst [vmem:[%s212] sm:$0xff] %v869
      %1350 = vst [vmem:[%s212 + $0x8] sm:$0xff] %v870
      %1351 = vst [vmem:[%s212 + $0x10] sm:$0xff] %v871
      %1352 = vst [vmem:[%s212 + $0x18] sm:$0xff] %v872
      %1353 = vst [vmem:[%s212 + $0x20] sm:$0xff] %v873
      %1354 = vst [vmem:[%s212 + $0x28] sm:$0xff] %v874
      %1355 = vst [vmem:[%s212 + $0x30] sm:$0xff] %v875
      %1356 = vst [vmem:[%s212 + $0x38] sm:$0xff] %v876
      %1357 = vst [vmem:[%s212 + $0x40] sm:$0xff] %v877
      %1358 = vst [vmem:[%s212 + $0x48] sm:$0xff] %v878
      %1359 = vst [vmem:[%s212 + $0x50] sm:$0xff] %v879
      %1360 = vst [vmem:[%s212 + $0x58] sm:$0xff] %v880
      %1361 = vst [vmem:[%s212 + $0x60] sm:$0xff] %v881
      %1362 = vst [vmem:[%s212 + $0x68] sm:$0xff] %v882
      %1363 = vst [vmem:[%s212 + $0x70] sm:$0xff] %v883
      %1364 = vst [vmem:[%s212 + $0x78] sm:$0xff] %v884
      %1365 = vst [vmem:[%s212 + $0x80] sm:$0xff] %v885
      %1366 = vst [vmem:[%s212 + $0x88] sm:$0xff] %v886
      %1367 = vst [vmem:[%s212 + $0x90] sm:$0xff] %v887
      %1368 = vst [vmem:[%s212 + $0x98] sm:$0xff] %v888
      %1369 = vst [vmem:[%s212 + $0xa0] sm:$0xff] %v889
      %1370 = vst [vmem:[%s212 + $0xa8] sm:$0xff] %v890
      %1371 = vst [vmem:[%s212 + $0xb0] sm:$0xff] %v891
      %1372 = vst [vmem:[%s212 + $0xb8] sm:$0xff] %v892
      %1373 = vst [vmem:[%s212 + $0xc0] sm:$0xff] %v893
      %1374 = vst [vmem:[%s212 + $0xc8] sm:$0xff] %v894
      %1375 = vst [vmem:[%s212 + $0xd0] sm:$0xff] %v895
      %1376 = vst [vmem:[%s212 + $0xd8] sm:$0xff] %v896
      %1377 = vst [vmem:[%s212 + $0xe0] sm:$0xff] %v897
      %1378 = vst [vmem:[%s212 + $0xe8] sm:$0xff] %v898
      %1379 = vst [vmem:[%s212 + $0xf0] sm:$0xff] %v899
      %1380 = vst [vmem:[%s212 + $0xf8] sm:$0xff] %v900
      %s1381 = scalar_lea.vmem %s212, 256
      %1382 = vst [vmem:[%s1381] sm:$0xff] %v933
      %1383 = vst [vmem:[%s1381 + $0x8] sm:$0xff] %v934
      %1384 = vst [vmem:[%s1381 + $0x10] sm:$0xff] %v935
      %1385 = vst [vmem:[%s1381 + $0x18] sm:$0xff] %v936
      %1386 = vst [vmem:[%s1381 + $0x20] sm:$0xff] %v937
      %1387 = vst [vmem:[%s1381 + $0x28] sm:$0xff] %v938
      %1388 = vst [vmem:[%s1381 + $0x30] sm:$0xff] %v939
      %1389 = vst [vmem:[%s1381 + $0x38] sm:$0xff] %v940
      %1390 = vst [vmem:[%s1381 + $0x40] sm:$0xff] %v941
      %1391 = vst [vmem:[%s1381 + $0x48] sm:$0xff] %v942
      %1392 = vst [vmem:[%s1381 + $0x50] sm:$0xff] %v943
      %1393 = vst [vmem:[%s1381 + $0x58] sm:$0xff] %v944
      %1394 = vst [vmem:[%s1381 + $0x60] sm:$0xff] %v945
      %1395 = vst [vmem:[%s1381 + $0x68] sm:$0xff] %v946
      %1396 = vst [vmem:[%s1381 + $0x70] sm:$0xff] %v947
      %1397 = vst [vmem:[%s1381 + $0x78] sm:$0xff] %v948
      %1398 = vst [vmem:[%s1381 + $0x80] sm:$0xff] %v949
      %1399 = vst [vmem:[%s1381 + $0x88] sm:$0xff] %v950
      %1400 = vst [vmem:[%s1381 + $0x90] sm:$0xff] %v951
      %1401 = vst [vmem:[%s1381 + $0x98] sm:$0xff] %v952
      %1402 = vst [vmem:[%s1381 + $0xa0] sm:$0xff] %v953
      %1403 = vst [vmem:[%s1381 + $0xa8] sm:$0xff] %v954
      %1404 = vst [vmem:[%s1381 + $0xb0] sm:$0xff] %v955
      %1405 = vst [vmem:[%s1381 + $0xb8] sm:$0xff] %v956
      %1406 = vst [vmem:[%s1381 + $0xc0] sm:$0xff] %v957
      %1407 = vst [vmem:[%s1381 + $0xc8] sm:$0xff] %v958
      %1408 = vst [vmem:[%s1381 + $0xd0] sm:$0xff] %v959
      %1409 = vst [vmem:[%s1381 + $0xd8] sm:$0xff] %v960
      %1410 = vst [vmem:[%s1381 + $0xe0] sm:$0xff] %v961
      %1411 = vst [vmem:[%s1381 + $0xe8] sm:$0xff] %v962
      %1412 = vst [vmem:[%s1381 + $0xf0] sm:$0xff] %v963
      %1413 = vst [vmem:[%s1381 + $0xf8] sm:$0xff] %v964
      %s1414 = scalar_lea.vmem %s212, 512
      %1415 = vst [vmem:[%s1414] sm:$0xff] %v1253
      %1416 = vst [vmem:[%s1414 + $0x8] sm:$0xff] %v1254
      %1417 = vst [vmem:[%s1414 + $0x10] sm:$0xff] %v1255
      %1418 = vst [vmem:[%s1414 + $0x18] sm:$0xff] %v1256
      %1419 = vst [vmem:[%s1414 + $0x20] sm:$0xff] %v1257
      %1420 = vst [vmem:[%s1414 + $0x28] sm:$0xff] %v1258
      %1421 = vst [vmem:[%s1414 + $0x30] sm:$0xff] %v1259
      %1422 = vst [vmem:[%s1414 + $0x38] sm:$0xff] %v1260
      %1423 = vst [vmem:[%s1414 + $0x40] sm:$0xff] %v1261
      %1424 = vst [vmem:[%s1414 + $0x48] sm:$0xff] %v1262
      %1425 = vst [vmem:[%s1414 + $0x50] sm:$0xff] %v1263
      %1426 = vst [vmem:[%s1414 + $0x58] sm:$0xff] %v1264
      %1427 = vst [vmem:[%s1414 + $0x60] sm:$0xff] %v1265
      %1428 = vst [vmem:[%s1414 + $0x68] sm:$0xff] %v1266
      %1429 = vst [vmem:[%s1414 + $0x70] sm:$0xff] %v1267
      %1430 = vst [vmem:[%s1414 + $0x78] sm:$0xff] %v1268
      %1431 = vst [vmem:[%s1414 + $0x80] sm:$0xff] %v1269
      %1432 = vst [vmem:[%s1414 + $0x88] sm:$0xff] %v1270
      %1433 = vst [vmem:[%s1414 + $0x90] sm:$0xff] %v1271
      %1434 = vst [vmem:[%s1414 + $0x98] sm:$0xff] %v1272
      %1435 = vst [vmem:[%s1414 + $0xa0] sm:$0xff] %v1273
      %1436 = vst [vmem:[%s1414 + $0xa8] sm:$0xff] %v1274
      %1437 = vst [vmem:[%s1414 + $0xb0] sm:$0xff] %v1275
      %1438 = vst [vmem:[%s1414 + $0xb8] sm:$0xff] %v1276
      %1439 = vst [vmem:[%s1414 + $0xc0] sm:$0xff] %v1277
      %1440 = vst [vmem:[%s1414 + $0xc8] sm:$0xff] %v1278
      %1441 = vst [vmem:[%s1414 + $0xd0] sm:$0xff] %v1279
      %1442 = vst [vmem:[%s1414 + $0xd8] sm:$0xff] %v1280
      %1443 = vst [vmem:[%s1414 + $0xe0] sm:$0xff] %v1281
      %1444 = vst [vmem:[%s1414 + $0xe8] sm:$0xff] %v1282
      %1445 = vst [vmem:[%s1414 + $0xf0] sm:$0xff] %v1283
      %1446 = vst [vmem:[%s1414 + $0xf8] sm:$0xff] %v1284
      %s1447 = scalar_lea.vmem %s212, 768
      %1448 = vst [vmem:[%s1447] sm:$0xff] %v1317
      %1449 = vst [vmem:[%s1447 + $0x8] sm:$0xff] %v1318
      %1450 = vst [vmem:[%s1447 + $0x10] sm:$0xff] %v1319
      %1451 = vst [vmem:[%s1447 + $0x18] sm:$0xff] %v1320
      %1452 = vst [vmem:[%s1447 + $0x20] sm:$0xff] %v1321
      %1453 = vst [vmem:[%s1447 + $0x28] sm:$0xff] %v1322
      %1454 = vst [vmem:[%s1447 + $0x30] sm:$0xff] %v1323
      %1455 = vst [vmem:[%s1447 + $0x38] sm:$0xff] %v1324
      %1456 = vst [vmem:[%s1447 + $0x40] sm:$0xff] %v1325
      %1457 = vst [vmem:[%s1447 + $0x48] sm:$0xff] %v1326
      %1458 = vst [vmem:[%s1447 + $0x50] sm:$0xff] %v1327
      %1459 = vst [vmem:[%s1447 + $0x58] sm:$0xff] %v1328
      %1460 = vst [vmem:[%s1447 + $0x60] sm:$0xff] %v1329
      %1461 = vst [vmem:[%s1447 + $0x68] sm:$0xff] %v1330
      %1462 = vst [vmem:[%s1447 + $0x70] sm:$0xff] %v1331
      %1463 = vst [vmem:[%s1447 + $0x78] sm:$0xff] %v1332
      %1464 = vst [vmem:[%s1447 + $0x80] sm:$0xff] %v1333
      %1465 = vst [vmem:[%s1447 + $0x88] sm:$0xff] %v1334
      %1466 = vst [vmem:[%s1447 + $0x90] sm:$0xff] %v1335
      %1467 = vst [vmem:[%s1447 + $0x98] sm:$0xff] %v1336
      %1468 = vst [vmem:[%s1447 + $0xa0] sm:$0xff] %v1337
      %1469 = vst [vmem:[%s1447 + $0xa8] sm:$0xff] %v1338
      %1470 = vst [vmem:[%s1447 + $0xb0] sm:$0xff] %v1339
      %1471 = vst [vmem:[%s1447 + $0xb8] sm:$0xff] %v1340
      %1472 = vst [vmem:[%s1447 + $0xc0] sm:$0xff] %v1341
      %1473 = vst [vmem:[%s1447 + $0xc8] sm:$0xff] %v1342
      %1474 = vst [vmem:[%s1447 + $0xd0] sm:$0xff] %v1343
      %1475 = vst [vmem:[%s1447 + $0xd8] sm:$0xff] %v1344
      %1476 = vst [vmem:[%s1447 + $0xe0] sm:$0xff] %v1345
      %1477 = vst [vmem:[%s1447 + $0xe8] sm:$0xff] %v1346
      %1478 = vst [vmem:[%s1447 + $0xf0] sm:$0xff] %v1347
      %1479 = vst [vmem:[%s1447 + $0xf8] sm:$0xff] %v1348
      %p1480 = scmp.lt.s32.totalorder %s16, 1
      %s1481 = scalar_select %p1480, %s16, 1
      %s1482 = smul.addr %s1481, 32
      %s1483 = smul.addr %s1482, 8
      %s1484 = scalar_lea.vmem %s3, %s1483
      %s1485 = smul.u32 4, %s16
      %p1486 = scmp.lt.s32.totalorder %s1485, 7
      %s1487 = scalar_select %p1486, %s1485, 7
      %s1488 = smul.addr %s1487, 32
      %s1489 = smul.addr %s1488, 8
      %s1490 = scalar_lea.vmem %s4, %s1489
      // Predicated region
      $region33: #{decoder_block_forward.1} parent=31 // pred_check
        %p1491 = pneg %p102
      $region34: #{decoder_block_forward.1} parent=31 // pred_check_branch
        %1493 = sbr.rel (%p1491) target = $region36
      $region35: #{decoder_block_forward.1} parent=31 // pred_region
        _
      $region36: #{decoder_block_forward.1} parent=31 // pred_fallthru
        _
      // Predicated region
      $region37: #{decoder_block_forward.1} parent=31 // pred_check
        %p1494 = pneg %p128
      $region38: #{decoder_block_forward.1} parent=31 // pred_check_branch
        %1496 = sbr.rel (%p1494) target = $region40
      $region39: #{decoder_block_forward.1} parent=31 // pred_region
        %s1497 = smul.u32 4, %s16
      $region40: #{decoder_block_forward.1} parent=31 // pred_fallthru
        _
    $region32: #{decoder_block_forward.1} parent=5 // pred_fallthru
      _
    %p1498 = scmp.le.s32.totalorder 2, %s11
    // Predicated region
    $region41: #{decoder_block_forward.1} parent=5 // pred_check
      %p1499 = pneg %p1498
    $region42: #{decoder_block_forward.1} parent=5 // pred_check_branch
      %1501 = sbr.rel (%p1499) target = $region44
    $region43: #{decoder_block_forward.1} parent=5 // pred_region
      %s1502 = ssub.s32 %s11, 2
      // Predicated region
      $region45: #{decoder_block_forward.1} parent=43 // pred_check
        %p1503 = pneg %p108
      $region46: #{decoder_block_forward.1} parent=43 // pred_check_branch
        %1505 = sbr.rel (%p1503) target = $region48
      $region47: #{decoder_block_forward.1} parent=43 // pred_region
        %p1506 = scmp.lt.s32.totalorder %s17, 1
        %s1507 = scalar_select %p1506, %s17, 1
        %s1508 = smul.addr %s1507, 32
        %s1509 = smul.addr %s1508, 8
        %s1510 = scalar_lea.vmem %s3, %s1509
      $region48: #{decoder_block_forward.1} parent=43 // pred_fallthru
        _
      // Predicated region
      $region49: #{decoder_block_forward.1} parent=43 // pred_check
        %p1511 = pneg %p134
      $region50: #{decoder_block_forward.1} parent=43 // pred_check_branch
        %1513 = sbr.rel (%p1511) target = $region52
      $region51: #{decoder_block_forward.1} parent=43 // pred_region
        %s1514 = smul.u32 4, %s17
        %p1515 = scmp.lt.s32.totalorder %s1514, 7
        %s1516 = scalar_select %p1515, %s1514, 7
        %s1517 = smul.addr %s1516, 32
        %s1518 = smul.addr %s1517, 8
        %s1519 = scalar_lea.vmem %s4, %s1518
      $region52: #{decoder_block_forward.1} parent=43 // pred_fallthru
        _
    $region44: #{decoder_block_forward.1} parent=5 // pred_fallthru
      _
  $region6: #{decoder_block_forward.1} parent=0 // loop_footer
    %s15 = sadd.s32 1, %s11
  $region7: #{decoder_block_forward.1} parent=0 // loop_footer_branch
    %10 = sbr.rel target = $region3
  $region8: #{decoder_block_forward.1} parent=0 // loop_exit
    _

</llo_original>
